<compile_context>
chip_gen: v6e
topology: v6e:2x2x1
jax: 0.10.0
libtpu: 0.0.40
codegen_flags: <defaults>
</compile_context>

<pallas_src>
import functools

import numpy as np
import jax
import jax.numpy as jnp
from jax import lax
from jax.experimental import pallas as pl
from jax.experimental.pallas import tpu as pltpu

TAG_TO_IDX = {'B-art': 0, 'B-eve': 1, 'B-geo': 2, 'B-gpe': 3, 'B-nat': 4,
              'B-org': 5, 'B-per': 6, 'B-tim': 7, 'I-art': 8, 'I-eve': 9,
              'I-geo': 10, 'I-gpe': 11, 'I-nat': 12, 'I-org': 13, 'I-per': 14,
              'I-tim': 15, 'O': 16}
IDX_TO_TAG = {v: k for k, v in TAG_TO_IDX.items()}
NUM_TAGS = len(TAG_TO_IDX)          # 17
TAG_PAD = 128                       # lane-padded tag dimension


def _reversal_matrix(S):
    """(S, S) anti-identity built from iota (P @ x reverses rows of x)."""
    r = lax.broadcasted_iota(jnp.int32, (S, S), 0)
    c = lax.broadcasted_iota(jnp.int32, (S, S), 1)
    return (r + c == S - 1).astype(jnp.float32)


# ----------------------------------------------------------------------------
# Pallas kernel: bidirectional LSTM recurrence + hidden2tag projection with
# CRF start/end folded into the bias.
#
# Weight layout (prepared in the wrapper):
#   wih_ref : (E, 8H)    gate-interleaved columns [i_f|i_b|f_f|f_b|o_f|o_b|g_f|g_b]
#   b_ref   : (1, 8H)    same layout (b_ih + b_hh summed), f32
#   whh_ref : (2H, 8H)   block-diagonal: rows 0:H = fwd hidden, rows H:2H = bwd
#   wt_ref  : (2H, 128)  hidden2tag, zero-padded tag lanes
#   bt_ref  : (1, 128)   b_tag + CRF start + CRF end; pad lanes = -1e30, f32
# ----------------------------------------------------------------------------
def bilstm_crf_kernel(x_ref, wih_ref, b_ref, whh_ref, wt_ref, bt_ref,
                      scores_ref, xg_ref, hs_ref,
                      *, seq_len, hidden_half, unroll):
    S, H = seq_len, hidden_half
    H2, H4, H6, H8 = 2 * H, 4 * H, 6 * H, 8 * H

    # Fused input projection: both directions, all gates, all timesteps.
    xg = jnp.dot(x_ref[...], wih_ref[...],
                 preferred_element_type=jnp.float32) + b_ref[...]       # (S, 8H)

    # Step t consumes fwd input t and bwd input S-1-t.  Pre-swap the backward
    # lanes to reversed time order ONCE, off the recurrent critical path.
    rev = _reversal_matrix(S)                                           # (S, S)
    xg_rev = jnp.dot(rev, xg, preferred_element_type=jnp.float32)       # time-reversed
    lane = lax.broadcasted_iota(jnp.int32, (S, H8), 1)
    xg_ref[...] = jnp.where((lane % H2) < H, xg, xg_rev)                # (S, 8H)

    whh = whh_ref[...]                                                  # (2H, 8H)
    # TODO(synk): keep whh resident in the MXU weight registers across steps
    # (pltpu.matmul_push_rhs / matmul_acc_lhs / matmul_pop) instead of
    # re-pushing it every iteration.

    def step(t, h, c):
        xt = xg_ref[pl.ds(t, 1), :]                                     # (1, 8H)
        g = xt + jnp.dot(h.astype(whh.dtype), whh,
                         preferred_element_type=jnp.float32)            # (1, 8H)
        # One sigmoid push over (i, f, o) and one tanh push over g.
        # Every slice below is 128-lane aligned.
        sig = jax.nn.sigmoid(g[:, :H6])                                 # (1, 6H)
        gg = jnp.tanh(g[:, H6:H8])                                      # (1, 2H)
        c = sig[:, H2:H4] * c + sig[:, :H2] * gg                        # f*c + i*g
        h = sig[:, H4:H6] * jnp.tanh(c)                                 # o*tanh(c)
        hs_ref[pl.ds(t, 1), :] = h                                      # 128-lane store
        return h, c

    h0 = jnp.zeros((1, H2), jnp.float32)
    c0 = jnp.zeros((1, H2), jnp.float32)
    if unroll is True:
        # Short sentence: static unroll (per-step state bounded by scratch store).
        h, c = h0, c0
        for t in range(S):
            h, c = step(t, h, c)
    else:
        # Long sentence: rolled loop keeps live ranges at ~2 state vregs.
        lax.fori_loop(0, S, lambda t, hc: step(t, *hc), (h0, c0), unroll=unroll)

    # hs rows: [:, :H] = fwd hidden at time t, [:, H:] = bwd hidden at S-1-t.
    hs = hs_ref[...]
    hs_rev = jnp.dot(rev, hs, preferred_element_type=jnp.float32)
    lane2 = lax.broadcasted_iota(jnp.int32, (S, H2), 1)
    lstm_out = jnp.where(lane2 < H, hs, hs_rev)                         # (S, 2H)

    # hidden2tag + folded CRF start/end; pad lanes inherit the -1e30 bias so
    # the lane-dense output can be argmax'd directly.
    scores_ref[...] = jnp.dot(lstm_out.astype(wt_ref.dtype), wt_ref[...],
                              preferred_element_type=jnp.float32) + bt_ref[...]


# ----------------------------------------------------------------------------
# Wrapper: weight re-layout, pallas_call, and the (trivial) CRF decode.
#
# CRF note: the module feeds torchcrf emissions of shape (1, S, T) with the
# default batch_first=False, i.e. seq_len=1 and batch=S, so the pairwise
# transition matrix never participates and Viterbi degenerates to
# argmax_t(start[t] + emission[t] + end[t]) -- folded into the kernel bias.
# ----------------------------------------------------------------------------
def _relayout_params(params, H, weight_dtype):
    sl_i, sl_f, sl_g, sl_o = (slice(0, H), slice(H, 2 * H),
                              slice(2 * H, 3 * H), slice(3 * H, 4 * H))

    def interleave(wf, wb):
        # PyTorch per-direction gate order (i, f, g, o) ->
        #   [ i_f | i_b | f_f | f_b | o_f | o_b | g_f | g_b ]
        return jnp.concatenate([wf[:, sl_i], wb[:, sl_i],
                                wf[:, sl_f], wb[:, sl_f],
                                wf[:, sl_o], wb[:, sl_o],
                                wf[:, sl_g], wb[:, sl_g]], axis=1)

    wih_il = interleave(params['wih_f'], params['wih_b'])               # (E, 8H)
    b_il = interleave(params['b_f'], params['b_b'])                     # (1, 8H)
    zero = jnp.zeros_like(params['whh_f'])
    whh_bd = jnp.concatenate([interleave(params['whh_f'], zero),        # fwd rows
                              interleave(zero, params['whh_b'])],       # bwd rows
                             axis=0)                                    # (2H, 8H)

    wt_pad = jnp.zeros((2 * H, TAG_PAD), jnp.float32).at[:, :NUM_TAGS].set(
        params['w_tag'])
    bt = params['b_tag'] + params['start'] + params['end']              # (1, 17)
    bt_comb = jnp.full((1, TAG_PAD), -1e30, jnp.float32).at[:, :NUM_TAGS].set(bt)

    return (wih_il.astype(weight_dtype), b_il, whh_bd.astype(weight_dtype),
            wt_pad.astype(weight_dtype), bt_comb)


def _pick_unroll(S):
    if S <= 32:
        return True                      # fully static unroll
    for k in (8, 4, 2):
        if S % k == 0:
            return k
    return 1


@functools.partial(jax.jit, static_argnames=("weight_dtype",))
def bilstm_crf_forward(sentence, params, *, weight_dtype=jnp.float32):
    S, _ = sentence.shape
    H = params['whh_f'].shape[0]
    wih_il, b_il, whh_bd, wt_pad, bt_comb = _relayout_params(params, H, weight_dtype)
    unroll = _pick_unroll(S)

    kernel = functools.partial(bilstm_crf_kernel, seq_len=S, hidden_half=H,
                               unroll=unroll)
    vmem = pl.BlockSpec(memory_space=pltpu.MemorySpace.VMEM)
    scores_pad = pl.pallas_call(
        kernel,
        out_shape=jax.ShapeDtypeStruct((S, TAG_PAD), jnp.float32),
        in_specs=[vmem] * 6,
        out_specs=vmem,
        scratch_shapes=[pltpu.VMEM((S, 8 * H), jnp.float32),   # time-aligned gates
                        pltpu.VMEM((S, 2 * H), jnp.float32)],  # per-step hidden rows
    )(sentence.astype(weight_dtype), wih_il, b_il, whh_bd, wt_pad, bt_comb)

    pred = jnp.argmax(scores_pad, axis=-1).astype(jnp.int32)            # (S,)
    emissions = scores_pad[:, :NUM_TAGS] - (params['start'] + params['end'])
    return emissions, pred


# ----------------------------------------------------------------------------
# Deterministic parameter init (mirrors nn.LSTM / nn.Linear / torchcrf CRF),
# kept in PyTorch gate order (i, f, g, o); the wrapper does the re-layout.
# ----------------------------------------------------------------------------
def init_params(key, embed_dim, hidden_half):
    ks = jax.random.split(key, 12)
    u = lambda k, shape, b: jax.random.uniform(k, shape, jnp.float32, -b, b)

    kl = 1.0 / np.sqrt(hidden_half)
    wih_f = u(ks[0], (embed_dim, 4 * hidden_half), kl)
    whh_f = u(ks[1], (hidden_half, 4 * hidden_half), kl)
    b_f = u(ks[2], (1, 4 * hidden_half), kl) + u(ks[3], (1, 4 * hidden_half), kl)
    wih_b = u(ks[4], (embed_dim, 4 * hidden_half), kl)
    whh_b = u(ks[5], (hidden_half, 4 * hidden_half), kl)
    b_b = u(ks[6], (1, 4 * hidden_half), kl) + u(ks[7], (1, 4 * hidden_half), kl)

    klin = 1.0 / np.sqrt(2 * hidden_half)
    w_tag = u(ks[8], (2 * hidden_half, NUM_TAGS), klin)
    b_tag = u(ks[9], (1, NUM_TAGS), klin)

    start = u(ks[10], (1, NUM_TAGS), 0.1)
    end = u(ks[11], (1, NUM_TAGS), 0.1)
    # TODO(synk): the CRF pairwise transition matrix exists in the module but
    # never participates in this forward (torchcrf only sees length-1
    # sequences), so it is omitted.

    return dict(wih_f=wih_f, whh_f=whh_f, b_f=b_f,
                wih_b=wih_b, whh_b=whh_b, b_b=b_b,
                w_tag=w_tag, b_tag=b_tag, start=start, end=end)


# ----------------------------------------------------------------------------
# Pure-JAX reference (PyTorch gate order).  HIGHEST matmul precision so the
# XLA reference matches the kernel's full-f32 MXU matmuls.
# ----------------------------------------------------------------------------
def reference_forward(sentence, params):
    S, _ = sentence.shape
    H = params['whh_f'].shape[0]
    hp = lax.Precision.HIGHEST

    def cell(xg_t, h, c, whh):
        g = xg_t + jnp.dot(h, whh, precision=hp)
        i = jax.nn.sigmoid(g[:, 0 * H:1 * H])
        f = jax.nn.sigmoid(g[:, 1 * H:2 * H])
        gg = jnp.tanh(g[:, 2 * H:3 * H])
        o = jax.nn.sigmoid(g[:, 3 * H:4 * H])
        c = f * c + i * gg
        return o * jnp.tanh(c), c

    xg_f = jnp.dot(sentence, params['wih_f'], precision=hp) + params['b_f']
    xg_b = jnp.dot(sentence, params['wih_b'], precision=hp) + params['b_b']
    h = c = jnp.zeros((1, H), jnp.float32)
    hf = []
    for t in range(S):
        h, c = cell(xg_f[t:t + 1], h, c, params['whh_f'])
        hf.append(h)
    h = c = jnp.zeros((1, H), jnp.float32)
    hb = [None] * S
    for t in range(S - 1, -1, -1):
        h, c = cell(xg_b[t:t + 1], h, c, params['whh_b'])
        hb[t] = h
    lstm_out = jnp.concatenate([jnp.concatenate(hf, 0), jnp.concatenate(hb, 0)], 1)
    emis = jnp.dot(lstm_out, params['w_tag'], precision=hp) + params['b_tag']
    scores = emis + params['start'] + params['end']
    return emis, jnp.argmax(scores, axis=-1).astype(jnp.int32)


# ----------------------------------------------------------------------------
if __name__ == "__main__":
    SEQ_LEN = 8          # number of words in the sentence
    EMBED_DIM = 64       # w2v vector_size (synthetic)
    HIDDEN_DIM = 128     # module default -> per-direction hidden = 64

    key = jax.random.PRNGKey(0)
    kp, kx, kx2 = jax.random.split(key, 3)
    params = init_params(kp, EMBED_DIM, HIDDEN_DIM // 2)
    # torch module input is (1, SEQ_LEN, EMBED_DIM); kernel layout is (S, E).
    sentence = jax.random.normal(kx, (SEQ_LEN, EMBED_DIM), jnp.float32)

    # --- f32 weights: tight numerical check (statically unrolled path) ------
    emissions, pred = bilstm_crf_forward(sentence, params)
    (emissions, pred) = jax.block_until_ready((emissions, pred))
    emis_ref, pred_ref = reference_forward(sentence, params)
    assert emissions.shape == (SEQ_LEN, NUM_TAGS)
    np.testing.assert_allclose(np.asarray(emissions), np.asarray(emis_ref),
                               atol=1e-4, rtol=1e-4)
    assert np.array_equal(np.asarray(pred), np.asarray(pred_ref))

    # --- bf16 weights (v5e/v6e weight-DMA optimization): looser check -------
    emis_bf, pred_bf = bilstm_crf_forward(sentence, params,
                                          weight_dtype=jnp.bfloat16)
    jax.block_until_ready((emis_bf, pred_bf))
    np.testing.assert_allclose(np.asarray(emis_bf), np.asarray(emis_ref),
                               atol=5e-2, rtol=5e-2)

    # --- longer sentence exercises the rolled lax.fori_loop path ------------
    LONG_S = 40
    sentence_long = jax.random.normal(kx2, (LONG_S, EMBED_DIM), jnp.float32)
    emis_l, pred_l = bilstm_crf_forward(sentence_long, params)
    jax.block_until_ready((emis_l, pred_l))
    emis_lr, pred_lr = reference_forward(sentence_long, params)
    np.testing.assert_allclose(np.asarray(emis_l), np.asarray(emis_lr),
                               atol=1e-4, rtol=1e-4)
    assert np.array_equal(np.asarray(pred_l), np.asarray(pred_lr))

    _tags = [IDX_TO_TAG[int(i)] for i in np.asarray(pred)]  # inference output
    print("KERNEL_OK")
</pallas_src>

<mosaic_0001>
module attributes {stable_mosaic.version = 11 : i64} {
  func.func @bilstm_crf_kernel(%arg0: memref<8x64xf32, #tpu.memory_space<vmem>>, %arg1: memref<64x512xf32, #tpu.memory_space<vmem>>, %arg2: memref<1x512xf32, #tpu.memory_space<vmem>>, %arg3: memref<128x512xf32, #tpu.memory_space<vmem>>, %arg4: memref<128x128xf32, #tpu.memory_space<vmem>>, %arg5: memref<1x128xf32, #tpu.memory_space<vmem>>, %arg6: memref<8x128xf32, #tpu.memory_space<vmem>>, %arg7: memref<8x512xf32, #tpu.memory_space<vmem>>, %arg8: memref<8x128xf32, #tpu.memory_space<vmem>>) attributes {dimension_semantics = [], scalar_prefetch = 0 : i64, scratch_operands = 2 : i64, tpu.core_type = #tpu.core_type<tc>} {
    %c0 = arith.constant 0 : index
    %c0_0 = arith.constant 0 : index
    %0 = vector.load %arg0[%c0, %c0_0] : memref<8x64xf32, #tpu.memory_space<vmem>>, vector<8x64xf32>
    %c0_1 = arith.constant 0 : index
    %c0_2 = arith.constant 0 : index
    %1 = vector.load %arg1[%c0_1, %c0_2] : memref<64x512xf32, #tpu.memory_space<vmem>>, vector<64x512xf32>
    %cst = arith.constant dense<0.000000e+00> : vector<8x512xf32>
    %2 = tpu.matmul %0, %1, %cst {dimension_numbers = #tpu.dot_dimension_numbers<[1], [0], [0], [1], [0, 0, 1, 1], [], []>} : vector<8x64xf32>, vector<64x512xf32>, vector<8x512xf32> -> vector<8x512xf32>
    %c0_3 = arith.constant 0 : index
    %c0_4 = arith.constant 0 : index
    %3 = vector.load %arg2[%c0_3, %c0_4] : memref<1x512xf32, #tpu.memory_space<vmem>>, vector<1x512xf32>
    %4 = vector.broadcast %3 : vector<1x512xf32> to vector<8x512xf32>
    %5 = arith.addf %2, %4 : vector<8x512xf32>
    %6 = tpu.iota {dimensions = array<i32: 0>} : vector<8x8xi32>
    %7 = tpu.iota {dimensions = array<i32: 1>} : vector<8x8xi32>
    %8 = arith.addi %6, %7 : vector<8x8xi32>
    %c7_i32 = arith.constant 7 : i32
    %9 = vector.broadcast %c7_i32 : i32 to vector<8x8xi32>
    %10 = arith.cmpi eq, %8, %9 : vector<8x8xi32>
    %11 = arith.extui %10 : vector<8x8xi1> to vector<8x8xi32>
    %12 = arith.sitofp %11 : vector<8x8xi32> to vector<8x8xf32>
    %cst_5 = arith.constant dense<0.000000e+00> : vector<8x512xf32>
    %13 = tpu.matmul %12, %5, %cst_5 {dimension_numbers = #tpu.dot_dimension_numbers<[1], [0], [0], [1], [0, 0, 1, 1], [], []>} : vector<8x8xf32>, vector<8x512xf32>, vector<8x512xf32> -> vector<8x512xf32>
    %14 = tpu.iota {dimensions = array<i32: 1>} : vector<8x512xi32>
    %c128_i32 = arith.constant 128 : i32
    %c0_i32 = arith.constant 0 : i32
    %15 = arith.cmpi eq, %c128_i32, %c0_i32 : i32
    %c1_i32 = arith.constant 1 : i32
    %16 = arith.select %15, %c1_i32, %c128_i32 : i32
    %17 = vector.broadcast %16 : i32 to vector<8x512xi32>
    %18 = arith.remsi %14, %17 : vector<8x512xi32>
    %c0_i32_6 = arith.constant 0 : i32
    %19 = vector.broadcast %c0_i32_6 : i32 to vector<8x512xi32>
    %20 = arith.cmpi ne, %18, %19 : vector<8x512xi32>
    %c0_i32_7 = arith.constant 0 : i32
    %21 = vector.broadcast %c0_i32_7 : i32 to vector<8x512xi32>
    %22 = arith.cmpi slt, %18, %21 : vector<8x512xi32>
    %c0_i32_8 = arith.constant 0 : i32
    %23 = arith.cmpi slt, %16, %c0_i32_8 : i32
    %24 = vector.broadcast %23 : i1 to vector<8x512xi1>
    %25 = vector.broadcast %24 : vector<8x512xi1> to vector<8x512xi1>
    %26 = arith.xori %22, %25 : vector<8x512xi1>
    %27 = arith.andi %26, %20 : vector<8x512xi1>
    %28 = vector.broadcast %16 : i32 to vector<8x512xi32>
    %29 = arith.addi %18, %28 : vector<8x512xi32>
    %30 = arith.select %27, %29, %18 : vector<8x512xi1>, vector<8x512xi32>
    %c64_i32 = arith.constant 64 : i32
    %31 = vector.broadcast %c64_i32 : i32 to vector<8x512xi32>
    %32 = arith.cmpi slt, %30, %31 : vector<8x512xi32>
    %33 = arith.select %32, %5, %13 : vector<8x512xi1>, vector<8x512xf32>
    %c0_9 = arith.constant 0 : index
    %c0_10 = arith.constant 0 : index
    %34 = vector.load %arg7[%c0_9, %c0_10] : memref<8x512xf32, #tpu.memory_space<vmem>>, vector<8x512xf32>
    tpu.vector_store %arg7[%c0_9, %c0_10], %33 {strides = array<i32>} : memref<8x512xf32, #tpu.memory_space<vmem>>, vector<8x512xf32>,
    %c0_11 = arith.constant 0 : index
    %c0_12 = arith.constant 0 : index
    %35 = vector.load %arg3[%c0_11, %c0_12] : memref<128x512xf32, #tpu.memory_space<vmem>>, vector<128x512xf32>
    %cst_13 = arith.constant 0.000000e+00 : f32
    %36 = vector.broadcast %cst_13 : f32 to vector<1x128xf32>
    %cst_14 = arith.constant 0.000000e+00 : f32
    %37 = vector.broadcast %cst_14 : f32 to vector<1x128xf32>
    %c0_15 = arith.constant 0 : index
    %c0_16 = arith.constant 0 : index
    %38 = vector.load %arg7[%c0_15, %c0_16] : memref<8x512xf32, #tpu.memory_space<vmem>>, vector<1x512xf32>
    %cst_17 = arith.constant dense<0.000000e+00> : vector<1x512xf32>
    %39 = tpu.matmul %36, %35, %cst_17 {dimension_numbers = #tpu.dot_dimension_numbers<[1], [0], [0], [1], [0, 0, 1, 1], [], []>} : vector<1x128xf32>, vector<128x512xf32>, vector<1x512xf32> -> vector<1x512xf32>
    %40 = arith.addf %38, %39 : vector<1x512xf32>
    %41 = vector.extract_strided_slice %40 {offsets = [0, 0], sizes = [1, 384], strides = [1, 1]} : vector<1x512xf32> to vector<1x384xf32>
    %42 = arith.negf %41 : vector<1x384xf32>
    %43 = math.exp %42 : vector<1x384xf32>
    %cst_18 = arith.constant 1.000000e+00 : f32
    %44 = vector.broadcast %cst_18 : f32 to vector<1x384xf32>
    %45 = arith.addf %44, %43 : vector<1x384xf32>
    %46 = arith.divf %44, %45 : vector<1x384xf32>
    %47 = vector.extract_strided_slice %40 {offsets = [0, 384], sizes = [1, 128], strides = [1, 1]} : vector<1x512xf32> to vector<1x128xf32>
    %48 = math.tanh %47 : vector<1x128xf32>
    %49 = vector.extract_strided_slice %46 {offsets = [0, 128], sizes = [1, 128], strides = [1, 1]} : vector<1x384xf32> to vector<1x128xf32>
    %50 = arith.mulf %49, %37 : vector<1x128xf32>
    %51 = vector.extract_strided_slice %46 {offsets = [0, 0], sizes = [1, 128], strides = [1, 1]} : vector<1x384xf32> to vector<1x128xf32>
    %52 = arith.mulf %51, %48 : vector<1x128xf32>
    %53 = arith.addf %50, %52 : vector<1x128xf32>
    %54 = vector.extract_strided_slice %46 {offsets = [0, 256], sizes = [1, 128], strides = [1, 1]} : vector<1x384xf32> to vector<1x128xf32>
    %55 = math.tanh %53 : vector<1x128xf32>
    %56 = arith.mulf %54, %55 : vector<1x128xf32>
    %c0_19 = arith.constant 0 : index
    %c0_20 = arith.constant 0 : index
    %57 = vector.load %arg8[%c0_19, %c0_20] : memref<8x128xf32, #tpu.memory_space<vmem>>, vector<1x128xf32>
    tpu.vector_store %arg8[%c0_19, %c0_20], %56 {strides = array<i32>} : memref<8x128xf32, #tpu.memory_space<vmem>>, vector<1x128xf32>,
    %c1 = arith.constant 1 : index
    %c0_21 = arith.constant 0 : index
    %58 = vector.load %arg7[%c1, %c0_21] : memref<8x512xf32, #tpu.memory_space<vmem>>, vector<1x512xf32>
    %cst_22 = arith.constant dense<0.000000e+00> : vector<1x512xf32>
    %59 = tpu.matmul %56, %35, %cst_22 {dimension_numbers = #tpu.dot_dimension_numbers<[1], [0], [0], [1], [0, 0, 1, 1], [], []>} : vector<1x128xf32>, vector<128x512xf32>, vector<1x512xf32> -> vector<1x512xf32>
    %60 = arith.addf %58, %59 : vector<1x512xf32>
    %61 = vector.extract_strided_slice %60 {offsets = [0, 0], sizes = [1, 384], strides = [1, 1]} : vector<1x512xf32> to vector<1x384xf32>
    %62 = arith.negf %61 : vector<1x384xf32>
    %63 = math.exp %62 : vector<1x384xf32>
    %cst_23 = arith.constant 1.000000e+00 : f32
    %64 = vector.broadcast %cst_23 : f32 to vector<1x384xf32>
    %65 = arith.addf %64, %63 : vector<1x384xf32>
    %66 = arith.divf %64, %65 : vector<1x384xf32>
    %67 = vector.extract_strided_slice %60 {offsets = [0, 384], sizes = [1, 128], strides = [1, 1]} : vector<1x512xf32> to vector<1x128xf32>
    %68 = math.tanh %67 : vector<1x128xf32>
    %69 = vector.extract_strided_slice %66 {offsets = [0, 128], sizes = [1, 128], strides = [1, 1]} : vector<1x384xf32> to vector<1x128xf32>
    %70 = arith.mulf %69, %53 : vector<1x128xf32>
    %71 = vector.extract_strided_slice %66 {offsets = [0, 0], sizes = [1, 128], strides = [1, 1]} : vector<1x384xf32> to vector<1x128xf32>
    %72 = arith.mulf %71, %68 : vector<1x128xf32>
    %73 = arith.addf %70, %72 : vector<1x128xf32>
    %74 = vector.extract_strided_slice %66 {offsets = [0, 256], sizes = [1, 128], strides = [1, 1]} : vector<1x384xf32> to vector<1x128xf32>
    %75 = math.tanh %73 : vector<1x128xf32>
    %76 = arith.mulf %74, %75 : vector<1x128xf32>
    %c1_24 = arith.constant 1 : index
    %c0_25 = arith.constant 0 : index
    %77 = vector.load %arg8[%c1_24, %c0_25] : memref<8x128xf32, #tpu.memory_space<vmem>>, vector<1x128xf32>
    tpu.vector_store %arg8[%c1_24, %c0_25], %76 {strides = array<i32>} : memref<8x128xf32, #tpu.memory_space<vmem>>, vector<1x128xf32>,
    %c2 = arith.constant 2 : index
    %c0_26 = arith.constant 0 : index
    %78 = vector.load %arg7[%c2, %c0_26] : memref<8x512xf32, #tpu.memory_space<vmem>>, vector<1x512xf32>
    %cst_27 = arith.constant dense<0.000000e+00> : vector<1x512xf32>
    %79 = tpu.matmul %76, %35, %cst_27 {dimension_numbers = #tpu.dot_dimension_numbers<[1], [0], [0], [1], [0, 0, 1, 1], [], []>} : vector<1x128xf32>, vector<128x512xf32>, vector<1x512xf32> -> vector<1x512xf32>
    %80 = arith.addf %78, %79 : vector<1x512xf32>
    %81 = vector.extract_strided_slice %80 {offsets = [0, 0], sizes = [1, 384], strides = [1, 1]} : vector<1x512xf32> to vector<1x384xf32>
    %82 = arith.negf %81 : vector<1x384xf32>
    %83 = math.exp %82 : vector<1x384xf32>
    %cst_28 = arith.constant 1.000000e+00 : f32
    %84 = vector.broadcast %cst_28 : f32 to vector<1x384xf32>
    %85 = arith.addf %84, %83 : vector<1x384xf32>
    %86 = arith.divf %84, %85 : vector<1x384xf32>
    %87 = vector.extract_strided_slice %80 {offsets = [0, 384], sizes = [1, 128], strides = [1, 1]} : vector<1x512xf32> to vector<1x128xf32>
    %88 = math.tanh %87 : vector<1x128xf32>
    %89 = vector.extract_strided_slice %86 {offsets = [0, 128], sizes = [1, 128], strides = [1, 1]} : vector<1x384xf32> to vector<1x128xf32>
    %90 = arith.mulf %89, %73 : vector<1x128xf32>
    %91 = vector.extract_strided_slice %86 {offsets = [0, 0], sizes = [1, 128], strides = [1, 1]} : vector<1x384xf32> to vector<1x128xf32>
    %92 = arith.mulf %91, %88 : vector<1x128xf32>
    %93 = arith.addf %90, %92 : vector<1x128xf32>
    %94 = vector.extract_strided_slice %86 {offsets = [0, 256], sizes = [1, 128], strides = [1, 1]} : vector<1x384xf32> to vector<1x128xf32>
    %95 = math.tanh %93 : vector<1x128xf32>
    %96 = arith.mulf %94, %95 : vector<1x128xf32>
    %c2_29 = arith.constant 2 : index
    %c0_30 = arith.constant 0 : index
    %97 = vector.load %arg8[%c2_29, %c0_30] : memref<8x128xf32, #tpu.memory_space<vmem>>, vector<1x128xf32>
    tpu.vector_store %arg8[%c2_29, %c0_30], %96 {strides = array<i32>} : memref<8x128xf32, #tpu.memory_space<vmem>>, vector<1x128xf32>,
    %c3 = arith.constant 3 : index
    %c0_31 = arith.constant 0 : index
    %98 = vector.load %arg7[%c3, %c0_31] : memref<8x512xf32, #tpu.memory_space<vmem>>, vector<1x512xf32>
    %cst_32 = arith.constant dense<0.000000e+00> : vector<1x512xf32>
    %99 = tpu.matmul %96, %35, %cst_32 {dimension_numbers = #tpu.dot_dimension_numbers<[1], [0], [0], [1], [0, 0, 1, 1], [], []>} : vector<1x128xf32>, vector<128x512xf32>, vector<1x512xf32> -> vector<1x512xf32>
    %100 = arith.addf %98, %99 : vector<1x512xf32>
    %101 = vector.extract_strided_slice %100 {offsets = [0, 0], sizes = [1, 384], strides = [1, 1]} : vector<1x512xf32> to vector<1x384xf32>
    %102 = arith.negf %101 : vector<1x384xf32>
    %103 = math.exp %102 : vector<1x384xf32>
    %cst_33 = arith.constant 1.000000e+00 : f32
    %104 = vector.broadcast %cst_33 : f32 to vector<1x384xf32>
    %105 = arith.addf %104, %103 : vector<1x384xf32>
    %106 = arith.divf %104, %105 : vector<1x384xf32>
    %107 = vector.extract_strided_slice %100 {offsets = [0, 384], sizes = [1, 128], strides = [1, 1]} : vector<1x512xf32> to vector<1x128xf32>
    %108 = math.tanh %107 : vector<1x128xf32>
    %109 = vector.extract_strided_slice %106 {offsets = [0, 128], sizes = [1, 128], strides = [1, 1]} : vector<1x384xf32> to vector<1x128xf32>
    %110 = arith.mulf %109, %93 : vector<1x128xf32>
    %111 = vector.extract_strided_slice %106 {offsets = [0, 0], sizes = [1, 128], strides = [1, 1]} : vector<1x384xf32> to vector<1x128xf32>
    %112 = arith.mulf %111, %108 : vector<1x128xf32>
    %113 = arith.addf %110, %112 : vector<1x128xf32>
    %114 = vector.extract_strided_slice %106 {offsets = [0, 256], sizes = [1, 128], strides = [1, 1]} : vector<1x384xf32> to vector<1x128xf32>
    %115 = math.tanh %113 : vector<1x128xf32>
    %116 = arith.mulf %114, %115 : vector<1x128xf32>
    %c3_34 = arith.constant 3 : index
    %c0_35 = arith.constant 0 : index
    %117 = vector.load %arg8[%c3_34, %c0_35] : memref<8x128xf32, #tpu.memory_space<vmem>>, vector<1x128xf32>
    tpu.vector_store %arg8[%c3_34, %c0_35], %116 {strides = array<i32>} : memref<8x128xf32, #tpu.memory_space<vmem>>, vector<1x128xf32>,
    %c4 = arith.constant 4 : index
    %c0_36 = arith.constant 0 : index
    %118 = vector.load %arg7[%c4, %c0_36] : memref<8x512xf32, #tpu.memory_space<vmem>>, vector<1x512xf32>
    %cst_37 = arith.constant dense<0.000000e+00> : vector<1x512xf32>
    %119 = tpu.matmul %116, %35, %cst_37 {dimension_numbers = #tpu.dot_dimension_numbers<[1], [0], [0], [1], [0, 0, 1, 1], [], []>} : vector<1x128xf32>, vector<128x512xf32>, vector<1x512xf32> -> vector<1x512xf32>
    %120 = arith.addf %118, %119 : vector<1x512xf32>
    %121 = vector.extract_strided_slice %120 {offsets = [0, 0], sizes = [1, 384], strides = [1, 1]} : vector<1x512xf32> to vector<1x384xf32>
    %122 = arith.negf %121 : vector<1x384xf32>
    %123 = math.exp %122 : vector<1x384xf32>
    %cst_38 = arith.constant 1.000000e+00 : f32
    %124 = vector.broadcast %cst_38 : f32 to vector<1x384xf32>
    %125 = arith.addf %124, %123 : vector<1x384xf32>
    %126 = arith.divf %124, %125 : vector<1x384xf32>
    %127 = vector.extract_strided_slice %120 {offsets = [0, 384], sizes = [1, 128], strides = [1, 1]} : vector<1x512xf32> to vector<1x128xf32>
    %128 = math.tanh %127 : vector<1x128xf32>
    %129 = vector.extract_strided_slice %126 {offsets = [0, 128], sizes = [1, 128], strides = [1, 1]} : vector<1x384xf32> to vector<1x128xf32>
    %130 = arith.mulf %129, %113 : vector<1x128xf32>
    %131 = vector.extract_strided_slice %126 {offsets = [0, 0], sizes = [1, 128], strides = [1, 1]} : vector<1x384xf32> to vector<1x128xf32>
    %132 = arith.mulf %131, %128 : vector<1x128xf32>
    %133 = arith.addf %130, %132 : vector<1x128xf32>
    %134 = vector.extract_strided_slice %126 {offsets = [0, 256], sizes = [1, 128], strides = [1, 1]} : vector<1x384xf32> to vector<1x128xf32>
    %135 = math.tanh %133 : vector<1x128xf32>
    %136 = arith.mulf %134, %135 : vector<1x128xf32>
    %c4_39 = arith.constant 4 : index
    %c0_40 = arith.constant 0 : index
    %137 = vector.load %arg8[%c4_39, %c0_40] : memref<8x128xf32, #tpu.memory_space<vmem>>, vector<1x128xf32>
    tpu.vector_store %arg8[%c4_39, %c0_40], %136 {strides = array<i32>} : memref<8x128xf32, #tpu.memory_space<vmem>>, vector<1x128xf32>,
    %c5 = arith.constant 5 : index
    %c0_41 = arith.constant 0 : index
    %138 = vector.load %arg7[%c5, %c0_41] : memref<8x512xf32, #tpu.memory_space<vmem>>, vector<1x512xf32>
    %cst_42 = arith.constant dense<0.000000e+00> : vector<1x512xf32>
    %139 = tpu.matmul %136, %35, %cst_42 {dimension_numbers = #tpu.dot_dimension_numbers<[1], [0], [0], [1], [0, 0, 1, 1], [], []>} : vector<1x128xf32>, vector<128x512xf32>, vector<1x512xf32> -> vector<1x512xf32>
    %140 = arith.addf %138, %139 : vector<1x512xf32>
    %141 = vector.extract_strided_slice %140 {offsets = [0, 0], sizes = [1, 384], strides = [1, 1]} : vector<1x512xf32> to vector<1x384xf32>
    %142 = arith.negf %141 : vector<1x384xf32>
    %143 = math.exp %142 : vector<1x384xf32>
    %cst_43 = arith.constant 1.000000e+00 : f32
    %144 = vector.broadcast %cst_43 : f32 to vector<1x384xf32>
    %145 = arith.addf %144, %143 : vector<1x384xf32>
    %146 = arith.divf %144, %145 : vector<1x384xf32>
    %147 = vector.extract_strided_slice %140 {offsets = [0, 384], sizes = [1, 128], strides = [1, 1]} : vector<1x512xf32> to vector<1x128xf32>
    %148 = math.tanh %147 : vector<1x128xf32>
    %149 = vector.extract_strided_slice %146 {offsets = [0, 128], sizes = [1, 128], strides = [1, 1]} : vector<1x384xf32> to vector<1x128xf32>
    %150 = arith.mulf %149, %133 : vector<1x128xf32>
    %151 = vector.extract_strided_slice %146 {offsets = [0, 0], sizes = [1, 128], strides = [1, 1]} : vector<1x384xf32> to vector<1x128xf32>
    %152 = arith.mulf %151, %148 : vector<1x128xf32>
    %153 = arith.addf %150, %152 : vector<1x128xf32>
    %154 = vector.extract_strided_slice %146 {offsets = [0, 256], sizes = [1, 128], strides = [1, 1]} : vector<1x384xf32> to vector<1x128xf32>
    %155 = math.tanh %153 : vector<1x128xf32>
    %156 = arith.mulf %154, %155 : vector<1x128xf32>
    %c5_44 = arith.constant 5 : index
    %c0_45 = arith.constant 0 : index
    %157 = vector.load %arg8[%c5_44, %c0_45] : memref<8x128xf32, #tpu.memory_space<vmem>>, vector<1x128xf32>
    tpu.vector_store %arg8[%c5_44, %c0_45], %156 {strides = array<i32>} : memref<8x128xf32, #tpu.memory_space<vmem>>, vector<1x128xf32>,
    %c6 = arith.constant 6 : index
    %c0_46 = arith.constant 0 : index
    %158 = vector.load %arg7[%c6, %c0_46] : memref<8x512xf32, #tpu.memory_space<vmem>>, vector<1x512xf32>
    %cst_47 = arith.constant dense<0.000000e+00> : vector<1x512xf32>
    %159 = tpu.matmul %156, %35, %cst_47 {dimension_numbers = #tpu.dot_dimension_numbers<[1], [0], [0], [1], [0, 0, 1, 1], [], []>} : vector<1x128xf32>, vector<128x512xf32>, vector<1x512xf32> -> vector<1x512xf32>
    %160 = arith.addf %158, %159 : vector<1x512xf32>
    %161 = vector.extract_strided_slice %160 {offsets = [0, 0], sizes = [1, 384], strides = [1, 1]} : vector<1x512xf32> to vector<1x384xf32>
    %162 = arith.negf %161 : vector<1x384xf32>
    %163 = math.exp %162 : vector<1x384xf32>
    %cst_48 = arith.constant 1.000000e+00 : f32
    %164 = vector.broadcast %cst_48 : f32 to vector<1x384xf32>
    %165 = arith.addf %164, %163 : vector<1x384xf32>
    %166 = arith.divf %164, %165 : vector<1x384xf32>
    %167 = vector.extract_strided_slice %160 {offsets = [0, 384], sizes = [1, 128], strides = [1, 1]} : vector<1x512xf32> to vector<1x128xf32>
    %168 = math.tanh %167 : vector<1x128xf32>
    %169 = vector.extract_strided_slice %166 {offsets = [0, 128], sizes = [1, 128], strides = [1, 1]} : vector<1x384xf32> to vector<1x128xf32>
    %170 = arith.mulf %169, %153 : vector<1x128xf32>
    %171 = vector.extract_strided_slice %166 {offsets = [0, 0], sizes = [1, 128], strides = [1, 1]} : vector<1x384xf32> to vector<1x128xf32>
    %172 = arith.mulf %171, %168 : vector<1x128xf32>
    %173 = arith.addf %170, %172 : vector<1x128xf32>
    %174 = vector.extract_strided_slice %166 {offsets = [0, 256], sizes = [1, 128], strides = [1, 1]} : vector<1x384xf32> to vector<1x128xf32>
    %175 = math.tanh %173 : vector<1x128xf32>
    %176 = arith.mulf %174, %175 : vector<1x128xf32>
    %c6_49 = arith.constant 6 : index
    %c0_50 = arith.constant 0 : index
    %177 = vector.load %arg8[%c6_49, %c0_50] : memref<8x128xf32, #tpu.memory_space<vmem>>, vector<1x128xf32>
    tpu.vector_store %arg8[%c6_49, %c0_50], %176 {strides = array<i32>} : memref<8x128xf32, #tpu.memory_space<vmem>>, vector<1x128xf32>,
    %c7 = arith.constant 7 : index
    %c0_51 = arith.constant 0 : index
    %178 = vector.load %arg7[%c7, %c0_51] : memref<8x512xf32, #tpu.memory_space<vmem>>, vector<1x512xf32>
    %cst_52 = arith.constant dense<0.000000e+00> : vector<1x512xf32>
    %179 = tpu.matmul %176, %35, %cst_52 {dimension_numbers = #tpu.dot_dimension_numbers<[1], [0], [0], [1], [0, 0, 1, 1], [], []>} : vector<1x128xf32>, vector<128x512xf32>, vector<1x512xf32> -> vector<1x512xf32>
    %180 = arith.addf %178, %179 : vector<1x512xf32>
    %181 = vector.extract_strided_slice %180 {offsets = [0, 0], sizes = [1, 384], strides = [1, 1]} : vector<1x512xf32> to vector<1x384xf32>
    %182 = arith.negf %181 : vector<1x384xf32>
    %183 = math.exp %182 : vector<1x384xf32>
    %cst_53 = arith.constant 1.000000e+00 : f32
    %184 = vector.broadcast %cst_53 : f32 to vector<1x384xf32>
    %185 = arith.addf %184, %183 : vector<1x384xf32>
    %186 = arith.divf %184, %185 : vector<1x384xf32>
    %187 = vector.extract_strided_slice %180 {offsets = [0, 384], sizes = [1, 128], strides = [1, 1]} : vector<1x512xf32> to vector<1x128xf32>
    %188 = math.tanh %187 : vector<1x128xf32>
    %189 = vector.extract_strided_slice %186 {offsets = [0, 128], sizes = [1, 128], strides = [1, 1]} : vector<1x384xf32> to vector<1x128xf32>
    %190 = arith.mulf %189, %173 : vector<1x128xf32>
    %191 = vector.extract_strided_slice %186 {offsets = [0, 0], sizes = [1, 128], strides = [1, 1]} : vector<1x384xf32> to vector<1x128xf32>
    %192 = arith.mulf %191, %188 : vector<1x128xf32>
    %193 = arith.addf %190, %192 : vector<1x128xf32>
    %194 = vector.extract_strided_slice %186 {offsets = [0, 256], sizes = [1, 128], strides = [1, 1]} : vector<1x384xf32> to vector<1x128xf32>
    %195 = math.tanh %193 : vector<1x128xf32>
    %196 = arith.mulf %194, %195 : vector<1x128xf32>
    %c7_54 = arith.constant 7 : index
    %c0_55 = arith.constant 0 : index
    %197 = vector.load %arg8[%c7_54, %c0_55] : memref<8x128xf32, #tpu.memory_space<vmem>>, vector<1x128xf32>
    tpu.vector_store %arg8[%c7_54, %c0_55], %196 {strides = array<i32>} : memref<8x128xf32, #tpu.memory_space<vmem>>, vector<1x128xf32>,
    %c0_56 = arith.constant 0 : index
    %c0_57 = arith.constant 0 : index
    %198 = vector.load %arg8[%c0_56, %c0_57] : memref<8x128xf32, #tpu.memory_space<vmem>>, vector<8x128xf32>
    %cst_58 = arith.constant dense<0.000000e+00> : vector<8x128xf32>
    %199 = tpu.matmul %12, %198, %cst_58 {dimension_numbers = #tpu.dot_dimension_numbers<[1], [0], [0], [1], [0, 0, 1, 1], [], []>} : vector<8x8xf32>, vector<8x128xf32>, vector<8x128xf32> -> vector<8x128xf32>
    %200 = tpu.iota {dimensions = array<i32: 1>} : vector<8x128xi32>
    %c64_i32_59 = arith.constant 64 : i32
    %201 = vector.broadcast %c64_i32_59 : i32 to vector<8x128xi32>
    %202 = arith.cmpi slt, %200, %201 : vector<8x128xi32>
    %203 = arith.select %202, %198, %199 : vector<8x128xi1>, vector<8x128xf32>
    %c0_60 = arith.constant 0 : index
    %c0_61 = arith.constant 0 : index
    %204 = vector.load %arg4[%c0_60, %c0_61] : memref<128x128xf32, #tpu.memory_space<vmem>>, vector<128x128xf32>
    %cst_62 = arith.constant dense<0.000000e+00> : vector<8x128xf32>
    %205 = tpu.matmul %203, %204, %cst_62 {dimension_numbers = #tpu.dot_dimension_numbers<[1], [0], [0], [1], [0, 0, 1, 1], [], []>} : vector<8x128xf32>, vector<128x128xf32>, vector<8x128xf32> -> vector<8x128xf32>
    %c0_63 = arith.constant 0 : index
    %c0_64 = arith.constant 0 : index
    %206 = vector.load %arg5[%c0_63, %c0_64] : memref<1x128xf32, #tpu.memory_space<vmem>>, vector<1x128xf32>
    %207 = vector.broadcast %206 : vector<1x128xf32> to vector<8x128xf32>
    %208 = arith.addf %205, %207 : vector<8x128xf32>
    %c0_65 = arith.constant 0 : index
    %c0_66 = arith.constant 0 : index
    %209 = vector.load %arg6[%c0_65, %c0_66] : memref<8x128xf32, #tpu.memory_space<vmem>>, vector<8x128xf32>
    tpu.vector_store %arg6[%c0_65, %c0_66], %208 {strides = array<i32>} : memref<8x128xf32, #tpu.memory_space<vmem>>, vector<8x128xf32>,
    return
  }
}

</mosaic_0001>

<llo_original>
// kernel: bilstm_crf_forward.1
$region0: #{bilstm_crf_forward.1}
  #allocation0 [shape = 'u32[]', space=smem, size = 0x4, offset = 0x4, fixed_abs, tag = 'smem constant byte address 0x4 - core index']
  #allocation1 [shape = 'u32[144,128]{1,0:T(1,128)}', space=vmem, size = 0x12000, scoped, tag = 'internal scratch']
  #allocation2 [shape = 'f32[8,512]{1,0:T(8,128)}', space=vmem, size = 0x4000, scoped, tag = 'scratch operand']
  #allocation3 [shape = 'f32[8,128]{1,0:T(8,128)}', space=vmem, size = 0x1000, scoped, tag = 'scratch operand']
  %s0 = inlined_call_operand.vmem [shape: f32[8,64], index: 0, kind: input, shape index: {}]
  %s1 = inlined_call_operand.vmem [shape: f32[64,512], index: 1, kind: input, shape index: {}]
  %s2 = inlined_call_operand.vmem [shape: f32[1,512], index: 2, kind: input, shape index: {}]
  %s3 = inlined_call_operand.vmem [shape: f32[128,512], index: 3, kind: input, shape index: {}]
  %s4 = inlined_call_operand.vmem [shape: f32[128,128], index: 4, kind: input, shape index: {}]
  %s5 = inlined_call_operand.vmem [shape: f32[1,128], index: 5, kind: input, shape index: {}]
  %s6 = inlined_call_operand.vmem [shape: f32[8,128], index: 6, kind: output, shape index: {}]
  %s7 = sld [smem:[#allocation0]]
  $region34: #{bilstm_crf_forward.1} parent=0
    _
  %s9 = ssub.s32 1, %s7
  %s10 = scalar_select 0, %s9, %s7
  // Predicated region
  $region2: #{bilstm_crf_forward.1} parent=0 // pred_check
    _
  $region3: #{bilstm_crf_forward.1} parent=0 // pred_check_branch
    %12 = sbr.rel (0) target = $region5
  $region4: #{bilstm_crf_forward.1} parent=0 // pred_region
    _
  $region5: #{bilstm_crf_forward.1} parent=0 // pred_fallthru
    _
  // Predicated region
  $region6: #{bilstm_crf_forward.1} parent=0 // pred_check
    _
  $region7: #{bilstm_crf_forward.1} parent=0 // pred_check_branch
    %14 = sbr.rel (0) target = $region9
  $region8: #{bilstm_crf_forward.1} parent=0 // pred_region
    _
  $region9: #{bilstm_crf_forward.1} parent=0 // pred_fallthru
    _
  // Predicated region
  $region10: #{bilstm_crf_forward.1} parent=0 // pred_check
    _
  $region11: #{bilstm_crf_forward.1} parent=0 // pred_check_branch
    %16 = sbr.rel (0) target = $region13
  $region12: #{bilstm_crf_forward.1} parent=0 // pred_region
    _
  $region13: #{bilstm_crf_forward.1} parent=0 // pred_fallthru
    _
  // Predicated region
  $region14: #{bilstm_crf_forward.1} parent=0 // pred_check
    _
  $region15: #{bilstm_crf_forward.1} parent=0 // pred_check_branch
    %18 = sbr.rel (0) target = $region17
  $region16: #{bilstm_crf_forward.1} parent=0 // pred_region
    _
  $region17: #{bilstm_crf_forward.1} parent=0 // pred_fallthru
    _
  // Predicated region
  $region18: #{bilstm_crf_forward.1} parent=0 // pred_check
    _
  $region19: #{bilstm_crf_forward.1} parent=0 // pred_check_branch
    %20 = sbr.rel (0) target = $region21
  $region20: #{bilstm_crf_forward.1} parent=0 // pred_region
    _
  $region21: #{bilstm_crf_forward.1} parent=0 // pred_fallthru
    _
  // Predicated region
  $region22: #{bilstm_crf_forward.1} parent=0 // pred_check
    _
  $region23: #{bilstm_crf_forward.1} parent=0 // pred_check_branch
    %22 = sbr.rel (0) target = $region25
  $region24: #{bilstm_crf_forward.1} parent=0 // pred_region
    _
  $region25: #{bilstm_crf_forward.1} parent=0 // pred_fallthru
    _
  %v23 = vld [vmem:[%s0] sm:$0xff]
  %v24 = vld [vmem:[%s1] sm:$0xff]
  %v25 = vld [vmem:[%s1 + $0x8] sm:$0xff]
  %v26 = vld [vmem:[%s1 + $0x10] sm:$0xff]
  %v27 = vld [vmem:[%s1 + $0x18] sm:$0xff]
  %v28 = vld [vmem:[%s1 + $0x20] sm:$0xff]
  %v29 = vld [vmem:[%s1 + $0x28] sm:$0xff]
  %v30 = vld [vmem:[%s1 + $0x30] sm:$0xff]
  %v31 = vld [vmem:[%s1 + $0x38] sm:$0xff]
  %v32 = vld [vmem:[%s1 + $0x40] sm:$0xff]
  %v33 = vld [vmem:[%s1 + $0x48] sm:$0xff]
  %v34 = vld [vmem:[%s1 + $0x50] sm:$0xff]
  %v35 = vld [vmem:[%s1 + $0x58] sm:$0xff]
  %v36 = vld [vmem:[%s1 + $0x60] sm:$0xff]
  %v37 = vld [vmem:[%s1 + $0x68] sm:$0xff]
  %v38 = vld [vmem:[%s1 + $0x70] sm:$0xff]
  %v39 = vld [vmem:[%s1 + $0x78] sm:$0xff]
  %v40 = vld [vmem:[%s1 + $0x80] sm:$0xff]
  %v41 = vld [vmem:[%s1 + $0x88] sm:$0xff]
  %v42 = vld [vmem:[%s1 + $0x90] sm:$0xff]
  %v43 = vld [vmem:[%s1 + $0x98] sm:$0xff]
  %v44 = vld [vmem:[%s1 + $0xa0] sm:$0xff]
  %v45 = vld [vmem:[%s1 + $0xa8] sm:$0xff]
  %v46 = vld [vmem:[%s1 + $0xb0] sm:$0xff]
  %v47 = vld [vmem:[%s1 + $0xb8] sm:$0xff]
  %v48 = vld [vmem:[%s1 + $0xc0] sm:$0xff]
  %v49 = vld [vmem:[%s1 + $0xc8] sm:$0xff]
  %v50 = vld [vmem:[%s1 + $0xd0] sm:$0xff]
  %v51 = vld [vmem:[%s1 + $0xd8] sm:$0xff]
  %v52 = vld [vmem:[%s1 + $0xe0] sm:$0xff]
  %v53 = vld [vmem:[%s1 + $0xe8] sm:$0xff]
  %v54 = vld [vmem:[%s1 + $0xf0] sm:$0xff]
  %v55 = vld [vmem:[%s1 + $0xf8] sm:$0xff]
  %v56 = vld [vmem:[%s2] sm:$0xf]
  %v58 = vlaneseq
  %v59 = vshrl.u32 %v58, 7
  %v60 = vsub.s32 0, %v59
  %v61 = vrot.slane %v56, %v60
  %v62 = vlaneseq
  %v63 = vshrl.u32 %v62, 7
  %v64 = vsub.s32 1, %v63
  %v65 = vrot.slane %v56, %v64
  %v66 = vlaneseq
  %v67 = vshrl.u32 %v66, 7
  %v68 = vsub.s32 2, %v67
  %v69 = vrot.slane %v56, %v68
  %v70 = vlaneseq
  %v71 = vshrl.u32 %v70, 7
  %v72 = vsub.s32 3, %v71
  %v73 = vrot.slane %v56, %v72
  %vm78 = vcmask 523264
  %v80 = vsel %vm78, %v23, 0
  %82 = vmatprep.subr.mxu0 0.0
  %83 = vmatpush1.msra.mxu0 0.0
  %84 = vmatprep.subr.mxu0 0.0
  %85 = vmatpush1.msra.mxu0 0.0
  %86 = vmatprep.subr.mxu0 0.0
  %87 = vmatpush1.msra.mxu0 0.0
  %88 = vmatprep.subr.mxu0 0.0
  %89 = vmatpush1.msra.mxu0 0.0
  %90 = vmatprep.subr.mxu0 0.0
  %91 = vmatpush1.msra.mxu0 0.0
  %92 = vmatprep.subr.mxu0 0.0
  %93 = vmatpush1.msra.mxu0 0.0
  %94 = vmatprep.subr.mxu0 0.0
  %95 = vmatpush1.msra.mxu0 0.0
  %96 = vmatprep.subr.mxu0 0.0
  %97 = vmatpush1.msra.mxu0 0.0
  %98 = vmatprep.subr.mxu0 %v53
  %99 = vmatpush1.msra.mxu0 %v52
  %100 = vmatprep.subr.mxu0 %v49
  %101 = vmatpush1.msra.mxu0 %v48
  %102 = vmatprep.subr.mxu0 %v45
  %103 = vmatpush1.msra.mxu0 %v44
  %104 = vmatprep.subr.mxu0 %v41
  %105 = vmatpush1.msra.mxu0 %v40
  %106 = vmatprep.subr.mxu0 %v37
  %107 = vmatpush1.msra.mxu0 %v36
  %108 = vmatprep.subr.mxu0 %v33
  %109 = vmatpush1.msra.mxu0 %v32
  %110 = vmatprep.subr.mxu0 %v29
  %111 = vmatpush1.msra.mxu0 %v28
  %112 = vmatprep.subr.mxu0 %v25
  %113 = vmatpush1.msra.mxu0 %v24
  %114 = vmatprep.subr.mxu0 0.0
  %115 = vmatpush2.msra.mxu0 0.0
  %116 = vmatprep.subr.mxu0 0.0
  %117 = vmatpush2.msra.mxu0 0.0
  %118 = vmatprep.subr.mxu0 0.0
  %119 = vmatpush2.msra.mxu0 0.0
  %120 = vmatprep.subr.mxu0 0.0
  %121 = vmatpush2.msra.mxu0 0.0
  %122 = vmatprep.subr.mxu0 0.0
  %123 = vmatpush2.msra.mxu0 0.0
  %124 = vmatprep.subr.mxu0 0.0
  %125 = vmatpush2.msra.mxu0 0.0
  %126 = vmatprep.subr.mxu0 0.0
  %127 = vmatpush2.msra.mxu0 0.0
  %128 = vmatprep.subr.mxu0 0.0
  %129 = vmatpush2.msra.mxu0 0.0
  %130 = vmatprep.subr.mxu0 0.0
  %131 = vmatpush2.msra.mxu0 0.0
  %132 = vmatprep.subr.mxu0 0.0
  %133 = vmatpush2.msra.mxu0 0.0
  %134 = vmatprep.subr.mxu0 0.0
  %135 = vmatpush2.msra.mxu0 0.0
  %136 = vmatprep.subr.mxu0 0.0
  %137 = vmatpush2.msra.mxu0 0.0
  %138 = vmatprep.subr.mxu0 0.0
  %139 = vmatpush2.msra.mxu0 0.0
  %140 = vmatprep.subr.mxu0 0.0
  %141 = vmatpush2.msra.mxu0 0.0
  %142 = vmatprep.subr.mxu0 0.0
  %143 = vmatpush2.msra.mxu0 0.0
  %144 = vmatprep.subr.mxu0 0.0
  %145 = vmatpush2.msra.mxu0 0.0
  %146 = vmatprep.mubr.f32.mxu0 0.0
  %147 = vmatmul.mubr.f32.gmra.mxu0 %v80
  %v148 = vpop.f32.mrf.mxu0
  %v149 = vadd.f32 %v61, %v148
  %v150 = vpop.f32.mrf.mxu0
  %v151 = vadd.f32 %v65, %v150
  %152 = vdwg.mxu0
  %153 = vmatprep.subr.mxu0 0.0
  %154 = vmatpush1.msra.mxu0 0.0
  %155 = vmatprep.subr.mxu0 0.0
  %156 = vmatpush1.msra.mxu0 0.0
  %157 = vmatprep.subr.mxu0 0.0
  %158 = vmatpush1.msra.mxu0 0.0
  %159 = vmatprep.subr.mxu0 0.0
  %160 = vmatpush1.msra.mxu0 0.0
  %161 = vmatprep.subr.mxu0 0.0
  %162 = vmatpush1.msra.mxu0 0.0
  %163 = vmatprep.subr.mxu0 0.0
  %164 = vmatpush1.msra.mxu0 0.0
  %165 = vmatprep.subr.mxu0 0.0
  %166 = vmatpush1.msra.mxu0 0.0
  %167 = vmatprep.subr.mxu0 0.0
  %168 = vmatpush1.msra.mxu0 0.0
  %169 = vmatprep.subr.mxu0 %v55
  %170 = vmatpush1.msra.mxu0 %v54
  %171 = vmatprep.subr.mxu0 %v51
  %172 = vmatpush1.msra.mxu0 %v50
  %173 = vmatprep.subr.mxu0 %v47
  %174 = vmatpush1.msra.mxu0 %v46
  %175 = vmatprep.subr.mxu0 %v43
  %176 = vmatpush1.msra.mxu0 %v42
  %177 = vmatprep.subr.mxu0 %v39
  %178 = vmatpush1.msra.mxu0 %v38
  %179 = vmatprep.subr.mxu0 %v35
  %180 = vmatpush1.msra.mxu0 %v34
  %181 = vmatprep.subr.mxu0 %v31
  %182 = vmatpush1.msra.mxu0 %v30
  %183 = vmatprep.subr.mxu0 %v27
  %184 = vmatpush1.msra.mxu0 %v26
  %185 = vmatprep.subr.mxu0 0.0
  %186 = vmatpush2.msra.mxu0 0.0
  %187 = vmatprep.subr.mxu0 0.0
  %188 = vmatpush2.msra.mxu0 0.0
  %189 = vmatprep.subr.mxu0 0.0
  %190 = vmatpush2.msra.mxu0 0.0
  %191 = vmatprep.subr.mxu0 0.0
  %192 = vmatpush2.msra.mxu0 0.0
  %193 = vmatprep.subr.mxu0 0.0
  %194 = vmatpush2.msra.mxu0 0.0
  %195 = vmatprep.subr.mxu0 0.0
  %196 = vmatpush2.msra.mxu0 0.0
  %197 = vmatprep.subr.mxu0 0.0
  %198 = vmatpush2.msra.mxu0 0.0
  %199 = vmatprep.subr.mxu0 0.0
  %200 = vmatpush2.msra.mxu0 0.0
  %201 = vmatprep.subr.mxu0 0.0
  %202 = vmatpush2.msra.mxu0 0.0
  %203 = vmatprep.subr.mxu0 0.0
  %204 = vmatpush2.msra.mxu0 0.0
  %205 = vmatprep.subr.mxu0 0.0
  %206 = vmatpush2.msra.mxu0 0.0
  %207 = vmatprep.subr.mxu0 0.0
  %208 = vmatpush2.msra.mxu0 0.0
  %209 = vmatprep.subr.mxu0 0.0
  %210 = vmatpush2.msra.mxu0 0.0
  %211 = vmatprep.subr.mxu0 0.0
  %212 = vmatpush2.msra.mxu0 0.0
  %213 = vmatprep.subr.mxu0 0.0
  %214 = vmatpush2.msra.mxu0 0.0
  %215 = vmatprep.subr.mxu0 0.0
  %216 = vmatpush2.msra.mxu0 0.0
  %217 = vmatprep.mubr.f32.mxu0 0.0
  %218 = vmatmul.mubr.f32.gmra.mxu0 %v80
  %v219 = vpop.f32.mrf.mxu0
  %v220 = vadd.f32 %v69, %v219
  %v221 = vpop.f32.mrf.mxu0
  %v222 = vadd.f32 %v73, %v221
  %223 = vdwg.mxu0
  %v224 = vlaneseq
  %v225 = vshrl.u32 %v224, 7
  %v226 = vlaneseq
  %v227 = vand.u32 %v226, 127
  %v228 = vadd.s32 %v225, %v227
  %vm229 = vcmp.eq.s32.totalorder %v228, 7
  %v230 = vsel %vm229, 1, 0
  %v231 = vcvt.s32.f32 %v230
  %vm232 = vcmask 64512
  %v234 = vsel %vm232, %v231, 0
  %236 = vmatprep.subr.mxu0 0.0
  %237 = vmatpush1.msra.mxu0 0.0
  %238 = vmatprep.subr.mxu0 0.0
  %239 = vmatpush1.msra.mxu0 0.0
  %240 = vmatprep.subr.mxu0 0.0
  %241 = vmatpush1.msra.mxu0 0.0
  %242 = vmatprep.subr.mxu0 0.0
  %243 = vmatpush1.msra.mxu0 0.0
  %244 = vmatprep.subr.mxu0 0.0
  %245 = vmatpush1.msra.mxu0 0.0
  %246 = vmatprep.subr.mxu0 0.0
  %247 = vmatpush1.msra.mxu0 0.0
  %248 = vmatprep.subr.mxu0 0.0
  %249 = vmatpush1.msra.mxu0 0.0
  %250 = vmatprep.subr.mxu0 0.0
  %251 = vmatpush1.msra.mxu0 0.0
  %252 = vmatprep.subr.mxu0 0.0
  %253 = vmatpush1.msra.mxu0 0.0
  %254 = vmatprep.subr.mxu0 0.0
  %255 = vmatpush1.msra.mxu0 0.0
  %256 = vmatprep.subr.mxu0 0.0
  %257 = vmatpush1.msra.mxu0 0.0
  %258 = vmatprep.subr.mxu0 0.0
  %259 = vmatpush1.msra.mxu0 0.0
  %260 = vmatprep.subr.mxu0 0.0
  %261 = vmatpush1.msra.mxu0 0.0
  %262 = vmatprep.subr.mxu0 0.0
  %263 = vmatpush1.msra.mxu0 0.0
  %264 = vmatprep.subr.mxu0 0.0
  %265 = vmatpush1.msra.mxu0 0.0
  %266 = vmatprep.subr.mxu0 %v151
  %267 = vmatpush1.msra.mxu0 %v149
  %268 = vmatprep.subr.mxu0 0.0
  %269 = vmatpush2.msra.mxu0 0.0
  %270 = vmatprep.subr.mxu0 0.0
  %271 = vmatpush2.msra.mxu0 0.0
  %272 = vmatprep.subr.mxu0 0.0
  %273 = vmatpush2.msra.mxu0 0.0
  %274 = vmatprep.subr.mxu0 0.0
  %275 = vmatpush2.msra.mxu0 0.0
  %276 = vmatprep.subr.mxu0 0.0
  %277 = vmatpush2.msra.mxu0 0.0
  %278 = vmatprep.subr.mxu0 0.0
  %279 = vmatpush2.msra.mxu0 0.0
  %280 = vmatprep.subr.mxu0 0.0
  %281 = vmatpush2.msra.mxu0 0.0
  %282 = vmatprep.subr.mxu0 0.0
  %283 = vmatpush2.msra.mxu0 0.0
  %284 = vmatprep.subr.mxu0 0.0
  %285 = vmatpush2.msra.mxu0 0.0
  %286 = vmatprep.subr.mxu0 0.0
  %287 = vmatpush2.msra.mxu0 0.0
  %288 = vmatprep.subr.mxu0 0.0
  %289 = vmatpush2.msra.mxu0 0.0
  %290 = vmatprep.subr.mxu0 0.0
  %291 = vmatpush2.msra.mxu0 0.0
  %292 = vmatprep.subr.mxu0 0.0
  %293 = vmatpush2.msra.mxu0 0.0
  %294 = vmatprep.subr.mxu0 0.0
  %295 = vmatpush2.msra.mxu0 0.0
  %296 = vmatprep.subr.mxu0 0.0
  %297 = vmatpush2.msra.mxu0 0.0
  %298 = vmatprep.subr.mxu0 0.0
  %299 = vmatpush2.msra.mxu0 0.0
  %300 = vmatprep.mubr.f32.mxu0 0.0
  %301 = vmatmul.mubr.f32.gmra.mxu0 %v234
  %v302 = vpop.f32.mrf.mxu0
  %v303 = vadd.f32 0.0, %v302
  %v304 = vpop.f32.mrf.mxu0
  %v305 = vadd.f32 0.0, %v304
  %306 = vdwg.mxu0
  %307 = vmatprep.subr.mxu0 0.0
  %308 = vmatpush1.msra.mxu0 0.0
  %309 = vmatprep.subr.mxu0 0.0
  %310 = vmatpush1.msra.mxu0 0.0
  %311 = vmatprep.subr.mxu0 0.0
  %312 = vmatpush1.msra.mxu0 0.0
  %313 = vmatprep.subr.mxu0 0.0
  %314 = vmatpush1.msra.mxu0 0.0
  %315 = vmatprep.subr.mxu0 0.0
  %316 = vmatpush1.msra.mxu0 0.0
  %317 = vmatprep.subr.mxu0 0.0
  %318 = vmatpush1.msra.mxu0 0.0
  %319 = vmatprep.subr.mxu0 0.0
  %320 = vmatpush1.msra.mxu0 0.0
  %321 = vmatprep.subr.mxu0 0.0
  %322 = vmatpush1.msra.mxu0 0.0
  %323 = vmatprep.subr.mxu0 0.0
  %324 = vmatpush1.msra.mxu0 0.0
  %325 = vmatprep.subr.mxu0 0.0
  %326 = vmatpush1.msra.mxu0 0.0
  %327 = vmatprep.subr.mxu0 0.0
  %328 = vmatpush1.msra.mxu0 0.0
  %329 = vmatprep.subr.mxu0 0.0
  %330 = vmatpush1.msra.mxu0 0.0
  %331 = vmatprep.subr.mxu0 0.0
  %332 = vmatpush1.msra.mxu0 0.0
  %333 = vmatprep.subr.mxu0 0.0
  %334 = vmatpush1.msra.mxu0 0.0
  %335 = vmatprep.subr.mxu0 0.0
  %336 = vmatpush1.msra.mxu0 0.0
  %337 = vmatprep.subr.mxu0 %v222
  %338 = vmatpush1.msra.mxu0 %v220
  %339 = vmatprep.subr.mxu0 0.0
  %340 = vmatpush2.msra.mxu0 0.0
  %341 = vmatprep.subr.mxu0 0.0
  %342 = vmatpush2.msra.mxu0 0.0
  %343 = vmatprep.subr.mxu0 0.0
  %344 = vmatpush2.msra.mxu0 0.0
  %345 = vmatprep.subr.mxu0 0.0
  %346 = vmatpush2.msra.mxu0 0.0
  %347 = vmatprep.subr.mxu0 0.0
  %348 = vmatpush2.msra.mxu0 0.0
  %349 = vmatprep.subr.mxu0 0.0
  %350 = vmatpush2.msra.mxu0 0.0
  %351 = vmatprep.subr.mxu0 0.0
  %352 = vmatpush2.msra.mxu0 0.0
  %353 = vmatprep.subr.mxu0 0.0
  %354 = vmatpush2.msra.mxu0 0.0
  %355 = vmatprep.subr.mxu0 0.0
  %356 = vmatpush2.msra.mxu0 0.0
  %357 = vmatprep.subr.mxu0 0.0
  %358 = vmatpush2.msra.mxu0 0.0
  %359 = vmatprep.subr.mxu0 0.0
  %360 = vmatpush2.msra.mxu0 0.0
  %361 = vmatprep.subr.mxu0 0.0
  %362 = vmatpush2.msra.mxu0 0.0
  %363 = vmatprep.subr.mxu0 0.0
  %364 = vmatpush2.msra.mxu0 0.0
  %365 = vmatprep.subr.mxu0 0.0
  %366 = vmatpush2.msra.mxu0 0.0
  %367 = vmatprep.subr.mxu0 0.0
  %368 = vmatpush2.msra.mxu0 0.0
  %369 = vmatprep.subr.mxu0 0.0
  %370 = vmatpush2.msra.mxu0 0.0
  %371 = vmatprep.mubr.f32.mxu0 0.0
  %372 = vmatmul.mubr.f32.gmra.mxu0 %v234
  %v373 = vpop.f32.mrf.mxu0
  %v374 = vadd.f32 0.0, %v373
  %v375 = vpop.f32.mrf.mxu0
  %v376 = vadd.f32 0.0, %v375
  %377 = vdwg.mxu0
  %v378 = vadd.s32 %v227, 128
  %v379 = vadd.s32 %v227, 256
  %v380 = vadd.s32 %v227, 384
  %vm381 = vcmp.lt.s32.totalorder %v227, 0
  %v382 = vsub.s32 0, %v227
  %v383 = vsel %vm381, %v382, %v227
  %v384 = vshrl.u32 %v383, 7
  %v385 = vand.u32 %v383, 127
  %v386 = vsub.s32 0, %v385
  %v387 = vsel %vm381, %v386, %v385
  %vm388 = vcmp.lt.s32.totalorder %v378, 0
  %v389 = vsub.s32 0, %v378
  %v390 = vsel %vm388, %v389, %v378
  %v391 = vshrl.u32 %v390, 7
  %v392 = vand.u32 %v390, 127
  %v393 = vsub.s32 0, %v392
  %v394 = vsel %vm388, %v393, %v392
  %vm395 = vcmp.lt.s32.totalorder %v379, 0
  %v396 = vsub.s32 0, %v379
  %v397 = vsel %vm395, %v396, %v379
  %v398 = vshrl.u32 %v397, 7
  %v399 = vand.u32 %v397, 127
  %v400 = vsub.s32 0, %v399
  %v401 = vsel %vm395, %v400, %v399
  %vm402 = vcmp.lt.s32.totalorder %v380, 0
  %v403 = vsub.s32 0, %v380
  %v404 = vsel %vm402, %v403, %v380
  %v405 = vshrl.u32 %v404, 7
  %v406 = vand.u32 %v404, 127
  %v407 = vsub.s32 0, %v406
  %v408 = vsel %vm402, %v407, %v406
  %vm409 = vcmp.ne.s32.totalorder %v387, 0
  %vm410 = vcmp.ne.s32.totalorder %v394, 0
  %vm411 = vcmp.ne.s32.totalorder %v401, 0
  %vm412 = vcmp.ne.s32.totalorder %v408, 0
  %vm413 = vcmp.lt.s32.totalorder %v387, 0
  %vm414 = vcmp.lt.s32.totalorder %v394, 0
  %vm415 = vcmp.lt.s32.totalorder %v401, 0
  %vm416 = vcmp.lt.s32.totalorder %v408, 0
  %vm417 = vmand %vm413, %vm409
  %vm418 = vmand %vm414, %vm410
  %vm419 = vmand %vm415, %vm411
  %vm420 = vmand %vm416, %vm412
  %v421 = vadd.s32 %v387, 128
  %v422 = vadd.s32 %v394, 128
  %v423 = vadd.s32 %v401, 128
  %v424 = vadd.s32 %v408, 128
  %v425 = vsel %vm417, %v421, %v387
  %v426 = vsel %vm418, %v422, %v394
  %v427 = vsel %vm419, %v423, %v401
  %v428 = vsel %vm420, %v424, %v408
  %vm429 = vcmp.lt.s32.totalorder %v425, 64
  %vm430 = vcmp.lt.s32.totalorder %v426, 64
  %vm431 = vcmp.lt.s32.totalorder %v427, 64
  %vm432 = vcmp.lt.s32.totalorder %v428, 64
  %v433 = vsel %vm429, %v149, %v303
  %v434 = vsel %vm430, %v151, %v305
  %v435 = vsel %vm431, %v220, %v374
  %v436 = vsel %vm432, %v222, %v376
  %437 = vst [vmem:[#allocation2] sm:$0xff] %v433
  %438 = vst [vmem:[#allocation2 + $0x8] sm:$0xff] %v434
  %439 = vst [vmem:[#allocation2 + $0x10] sm:$0xff] %v435
  %440 = vst [vmem:[#allocation2 + $0x18] sm:$0xff] %v436
  %v441 = vld [vmem:[%s3] sm:$0xff]
  %v442 = vld [vmem:[%s3 + $0x8] sm:$0xff]
  %v443 = vld [vmem:[%s3 + $0x10] sm:$0xff]
  %v444 = vld [vmem:[%s3 + $0x18] sm:$0xff]
  %v445 = vld [vmem:[%s3 + $0x20] sm:$0xff]
  %v446 = vld [vmem:[%s3 + $0x28] sm:$0xff]
  %v447 = vld [vmem:[%s3 + $0x30] sm:$0xff]
  %v448 = vld [vmem:[%s3 + $0x38] sm:$0xff]
  %v449 = vld [vmem:[%s3 + $0x40] sm:$0xff]
  %v450 = vld [vmem:[%s3 + $0x48] sm:$0xff]
  %v451 = vld [vmem:[%s3 + $0x50] sm:$0xff]
  %v452 = vld [vmem:[%s3 + $0x58] sm:$0xff]
  %v453 = vld [vmem:[%s3 + $0x60] sm:$0xff]
  %v454 = vld [vmem:[%s3 + $0x68] sm:$0xff]
  %v455 = vld [vmem:[%s3 + $0x70] sm:$0xff]
  %v456 = vld [vmem:[%s3 + $0x78] sm:$0xff]
  %v457 = vld [vmem:[%s3 + $0x80] sm:$0xff]
  %v458 = vld [vmem:[%s3 + $0x88] sm:$0xff]
  %v459 = vld [vmem:[%s3 + $0x90] sm:$0xff]
  %v460 = vld [vmem:[%s3 + $0x98] sm:$0xff]
  %v461 = vld [vmem:[%s3 + $0xa0] sm:$0xff]
  %v462 = vld [vmem:[%s3 + $0xa8] sm:$0xff]
  %v463 = vld [vmem:[%s3 + $0xb0] sm:$0xff]
  %v464 = vld [vmem:[%s3 + $0xb8] sm:$0xff]
  %v465 = vld [vmem:[%s3 + $0xc0] sm:$0xff]
  %v466 = vld [vmem:[%s3 + $0xc8] sm:$0xff]
  %v467 = vld [vmem:[%s3 + $0xd0] sm:$0xff]
  %v468 = vld [vmem:[%s3 + $0xd8] sm:$0xff]
  %v469 = vld [vmem:[%s3 + $0xe0] sm:$0xff]
  %v470 = vld [vmem:[%s3 + $0xe8] sm:$0xff]
  %v471 = vld [vmem:[%s3 + $0xf0] sm:$0xff]
  %v472 = vld [vmem:[%s3 + $0xf8] sm:$0xff]
  %v473 = vld [vmem:[%s3 + $0x100] sm:$0xff]
  %v474 = vld [vmem:[%s3 + $0x108] sm:$0xff]
  %v475 = vld [vmem:[%s3 + $0x110] sm:$0xff]
  %v476 = vld [vmem:[%s3 + $0x118] sm:$0xff]
  %v477 = vld [vmem:[%s3 + $0x120] sm:$0xff]
  %v478 = vld [vmem:[%s3 + $0x128] sm:$0xff]
  %v479 = vld [vmem:[%s3 + $0x130] sm:$0xff]
  %v480 = vld [vmem:[%s3 + $0x138] sm:$0xff]
  %v481 = vld [vmem:[%s3 + $0x140] sm:$0xff]
  %v482 = vld [vmem:[%s3 + $0x148] sm:$0xff]
  %v483 = vld [vmem:[%s3 + $0x150] sm:$0xff]
  %v484 = vld [vmem:[%s3 + $0x158] sm:$0xff]
  %v485 = vld [vmem:[%s3 + $0x160] sm:$0xff]
  %v486 = vld [vmem:[%s3 + $0x168] sm:$0xff]
  %v487 = vld [vmem:[%s3 + $0x170] sm:$0xff]
  %v488 = vld [vmem:[%s3 + $0x178] sm:$0xff]
  %v489 = vld [vmem:[%s3 + $0x180] sm:$0xff]
  %v490 = vld [vmem:[%s3 + $0x188] sm:$0xff]
  %v491 = vld [vmem:[%s3 + $0x190] sm:$0xff]
  %v492 = vld [vmem:[%s3 + $0x198] sm:$0xff]
  %v493 = vld [vmem:[%s3 + $0x1a0] sm:$0xff]
  %v494 = vld [vmem:[%s3 + $0x1a8] sm:$0xff]
  %v495 = vld [vmem:[%s3 + $0x1b0] sm:$0xff]
  %v496 = vld [vmem:[%s3 + $0x1b8] sm:$0xff]
  %v497 = vld [vmem:[%s3 + $0x1c0] sm:$0xff]
  %v498 = vld [vmem:[%s3 + $0x1c8] sm:$0xff]
  %v499 = vld [vmem:[%s3 + $0x1d0] sm:$0xff]
  %v500 = vld [vmem:[%s3 + $0x1d8] sm:$0xff]
  %v501 = vld [vmem:[%s3 + $0x1e0] sm:$0xff]
  %v502 = vld [vmem:[%s3 + $0x1e8] sm:$0xff]
  %v503 = vld [vmem:[%s3 + $0x1f0] sm:$0xff]
  %v504 = vld [vmem:[%s3 + $0x1f8] sm:$0xff]
  %v505 = vld [vmem:[#allocation2] ss:$8 sm:$0xf]
  %506 = vmatprep.subr.mxu0 %v502
  %507 = vmatpush1.msra.mxu0 %v501
  %508 = vmatprep.subr.mxu0 %v498
  %509 = vmatpush1.msra.mxu0 %v497
  %510 = vmatprep.subr.mxu0 %v494
  %511 = vmatpush1.msra.mxu0 %v493
  %512 = vmatprep.subr.mxu0 %v490
  %513 = vmatpush1.msra.mxu0 %v489
  %514 = vmatprep.subr.mxu0 %v486
  %515 = vmatpush1.msra.mxu0 %v485
  %516 = vmatprep.subr.mxu0 %v482
  %517 = vmatpush1.msra.mxu0 %v481
  %518 = vmatprep.subr.mxu0 %v478
  %519 = vmatpush1.msra.mxu0 %v477
  %520 = vmatprep.subr.mxu0 %v474
  %521 = vmatpush1.msra.mxu0 %v473
  %522 = vmatprep.subr.mxu0 %v470
  %523 = vmatpush1.msra.mxu0 %v469
  %524 = vmatprep.subr.mxu0 %v466
  %525 = vmatpush1.msra.mxu0 %v465
  %526 = vmatprep.subr.mxu0 %v462
  %527 = vmatpush1.msra.mxu0 %v461
  %528 = vmatprep.subr.mxu0 %v458
  %529 = vmatpush1.msra.mxu0 %v457
  %530 = vmatprep.subr.mxu0 %v454
  %531 = vmatpush1.msra.mxu0 %v453
  %532 = vmatprep.subr.mxu0 %v450
  %533 = vmatpush1.msra.mxu0 %v449
  %534 = vmatprep.subr.mxu0 %v446
  %535 = vmatpush1.msra.mxu0 %v445
  %536 = vmatprep.subr.mxu0 %v442
  %537 = vmatpush1.msra.mxu0 %v441
  %538 = vmatprep.subr.mxu0 0.0
  %539 = vmatpush2.msra.mxu0 0.0
  %540 = vmatprep.subr.mxu0 0.0
  %541 = vmatpush2.msra.mxu0 0.0
  %542 = vmatprep.subr.mxu0 0.0
  %543 = vmatpush2.msra.mxu0 0.0
  %544 = vmatprep.subr.mxu0 0.0
  %545 = vmatpush2.msra.mxu0 0.0
  %546 = vmatprep.subr.mxu0 0.0
  %547 = vmatpush2.msra.mxu0 0.0
  %548 = vmatprep.subr.mxu0 0.0
  %549 = vmatpush2.msra.mxu0 0.0
  %550 = vmatprep.subr.mxu0 0.0
  %551 = vmatpush2.msra.mxu0 0.0
  %552 = vmatprep.subr.mxu0 0.0
  %553 = vmatpush2.msra.mxu0 0.0
  %554 = vmatprep.subr.mxu0 0.0
  %555 = vmatpush2.msra.mxu0 0.0
  %556 = vmatprep.subr.mxu0 0.0
  %557 = vmatpush2.msra.mxu0 0.0
  %558 = vmatprep.subr.mxu0 0.0
  %559 = vmatpush2.msra.mxu0 0.0
  %560 = vmatprep.subr.mxu0 0.0
  %561 = vmatpush2.msra.mxu0 0.0
  %562 = vmatprep.subr.mxu0 0.0
  %563 = vmatpush2.msra.mxu0 0.0
  %564 = vmatprep.subr.mxu0 0.0
  %565 = vmatpush2.msra.mxu0 0.0
  %566 = vmatprep.subr.mxu0 0.0
  %567 = vmatpush2.msra.mxu0 0.0
  %568 = vmatprep.subr.mxu0 0.0
  %569 = vmatpush2.msra.mxu0 0.0
  %570 = vmatprep.mubr.f32.mxu0 0.0
  %571 = vmatmul.mubr.f32.gmra.mxu0 0.0
  %v572 = vpop.f32.mrf.mxu0
  %v573 = vadd.f32 0.0, %v572
  %v574 = vpop.f32.mrf.mxu0
  %v575 = vadd.f32 0.0, %v574
  %576 = vdwg.mxu0
  %577 = vmatprep.subr.mxu0 %v504
  %578 = vmatpush1.msra.mxu0 %v503
  %579 = vmatprep.subr.mxu0 %v500
  %580 = vmatpush1.msra.mxu0 %v499
  %581 = vmatprep.subr.mxu0 %v496
  %582 = vmatpush1.msra.mxu0 %v495
  %583 = vmatprep.subr.mxu0 %v492
  %584 = vmatpush1.msra.mxu0 %v491
  %585 = vmatprep.subr.mxu0 %v488
  %586 = vmatpush1.msra.mxu0 %v487
  %587 = vmatprep.subr.mxu0 %v484
  %588 = vmatpush1.msra.mxu0 %v483
  %589 = vmatprep.subr.mxu0 %v480
  %590 = vmatpush1.msra.mxu0 %v479
  %591 = vmatprep.subr.mxu0 %v476
  %592 = vmatpush1.msra.mxu0 %v475
  %593 = vmatprep.subr.mxu0 %v472
  %594 = vmatpush1.msra.mxu0 %v471
  %595 = vmatprep.subr.mxu0 %v468
  %596 = vmatpush1.msra.mxu0 %v467
  %597 = vmatprep.subr.mxu0 %v464
  %598 = vmatpush1.msra.mxu0 %v463
  %599 = vmatprep.subr.mxu0 %v460
  %600 = vmatpush1.msra.mxu0 %v459
  %601 = vmatprep.subr.mxu0 %v456
  %602 = vmatpush1.msra.mxu0 %v455
  %603 = vmatprep.subr.mxu0 %v452
  %604 = vmatpush1.msra.mxu0 %v451
  %605 = vmatprep.subr.mxu0 %v448
  %606 = vmatpush1.msra.mxu0 %v447
  %607 = vmatprep.subr.mxu0 %v444
  %608 = vmatpush1.msra.mxu0 %v443
  %609 = vmatprep.subr.mxu0 0.0
  %610 = vmatpush2.msra.mxu0 0.0
  %611 = vmatprep.subr.mxu0 0.0
  %612 = vmatpush2.msra.mxu0 0.0
  %613 = vmatprep.subr.mxu0 0.0
  %614 = vmatpush2.msra.mxu0 0.0
  %615 = vmatprep.subr.mxu0 0.0
  %616 = vmatpush2.msra.mxu0 0.0
  %617 = vmatprep.subr.mxu0 0.0
  %618 = vmatpush2.msra.mxu0 0.0
  %619 = vmatprep.subr.mxu0 0.0
  %620 = vmatpush2.msra.mxu0 0.0
  %621 = vmatprep.subr.mxu0 0.0
  %622 = vmatpush2.msra.mxu0 0.0
  %623 = vmatprep.subr.mxu0 0.0
  %624 = vmatpush2.msra.mxu0 0.0
  %625 = vmatprep.subr.mxu0 0.0
  %626 = vmatpush2.msra.mxu0 0.0
  %627 = vmatprep.subr.mxu0 0.0
  %628 = vmatpush2.msra.mxu0 0.0
  %629 = vmatprep.subr.mxu0 0.0
  %630 = vmatpush2.msra.mxu0 0.0
  %631 = vmatprep.subr.mxu0 0.0
  %632 = vmatpush2.msra.mxu0 0.0
  %633 = vmatprep.subr.mxu0 0.0
  %634 = vmatpush2.msra.mxu0 0.0
  %635 = vmatprep.subr.mxu0 0.0
  %636 = vmatpush2.msra.mxu0 0.0
  %637 = vmatprep.subr.mxu0 0.0
  %638 = vmatpush2.msra.mxu0 0.0
  %639 = vmatprep.subr.mxu0 0.0
  %640 = vmatpush2.msra.mxu0 0.0
  %641 = vmatprep.mubr.f32.mxu0 0.0
  %642 = vmatmul.mubr.f32.gmra.mxu0 0.0
  %v643 = vpop.f32.mrf.mxu0
  %v644 = vadd.f32 0.0, %v643
  %v645 = vpop.f32.mrf.mxu0
  %v646 = vadd.f32 0.0, %v645
  %647 = vdwg.mxu0
  %v652 = vcombine.low %v573, %v575
  %v653 = vcombine.low %v644, %v646
  %v655 = vunpack.c.l.s4 1966171168
  %v656 = vunpack.c.0.s8 %v655
  %v657 = vlaneseq
  %v658 = vshrl.u32 %v657, 7
  %v659 = vsub.s32 %v656, %v658
  %v660 = vrot.slane %v652, %v659
  %v662 = vunpack.c.l.s4 1966171168
  %v663 = vunpack.c.0.s8 %v662
  %v664 = vlaneseq
  %v665 = vshrl.u32 %v664, 7
  %v666 = vsub.s32 %v663, %v665
  %v667 = vrot.slane %v653, %v666
  %v668 = vcombine.low %v660, %v667
  %v670 = vunpack.c.l.s4 1966171168
  %v671 = vunpack.c.0.s8 %v670
  %v672 = vlaneseq
  %v673 = vshrl.u32 %v672, 7
  %v674 = vsub.s32 %v671, %v673
  %v675 = vrot.slane %v668, %v674
  %v677 = vadd.f32 %v505, %v675
  %v678 = vxor.u32 %v677, 2147483648
  %v679 = vmul.f32 %v678, 1.442695
  %v680 = vpow.pop %v679
  %v681 = vadd.f32 %v680, 1.0
  %v682 = vrcp.pop %v681
  %v683 = vmul.f32 1.0, %v682
  %v685 = vrot.slane %v677, 3
  %v687 = vtanh.pop %v685
  %v689 = vrot.slane %v683, 1
  %v691 = vmul.f32 %v689, 0.0
  %v692 = vmul.f32 %v683, %v687
  %v693 = vadd.f32 %v691, %v692
  %v694 = vtanh.pop %v693
  %v695 = vrot.slane %v683, 2
  %v697 = vmul.f32 %v695, %v694
  %698 = vst [vmem:[#allocation3] sm:$0x1] %v697
  %s699 = scalar_lea.vmem [#allocation2], 1
  %v700 = vld [vmem:[%s699] ss:$8 sm:$0xf]
  %701 = vmatprep.subr.mxu0 %v502
  %702 = vmatpush1.msra.mxu0 %v501
  %703 = vmatprep.subr.mxu0 %v498
  %704 = vmatpush1.msra.mxu0 %v497
  %705 = vmatprep.subr.mxu0 %v494
  %706 = vmatpush1.msra.mxu0 %v493
  %707 = vmatprep.subr.mxu0 %v490
  %708 = vmatpush1.msra.mxu0 %v489
  %709 = vmatprep.subr.mxu0 %v486
  %710 = vmatpush1.msra.mxu0 %v485
  %711 = vmatprep.subr.mxu0 %v482
  %712 = vmatpush1.msra.mxu0 %v481
  %713 = vmatprep.subr.mxu0 %v478
  %714 = vmatpush1.msra.mxu0 %v477
  %715 = vmatprep.subr.mxu0 %v474
  %716 = vmatpush1.msra.mxu0 %v473
  %717 = vmatprep.subr.mxu0 %v470
  %718 = vmatpush1.msra.mxu0 %v469
  %719 = vmatprep.subr.mxu0 %v466
  %720 = vmatpush1.msra.mxu0 %v465
  %721 = vmatprep.subr.mxu0 %v462
  %722 = vmatpush1.msra.mxu0 %v461
  %723 = vmatprep.subr.mxu0 %v458
  %724 = vmatpush1.msra.mxu0 %v457
  %725 = vmatprep.subr.mxu0 %v454
  %726 = vmatpush1.msra.mxu0 %v453
  %727 = vmatprep.subr.mxu0 %v450
  %728 = vmatpush1.msra.mxu0 %v449
  %729 = vmatprep.subr.mxu0 %v446
  %730 = vmatpush1.msra.mxu0 %v445
  %731 = vmatprep.subr.mxu0 %v442
  %732 = vmatpush1.msra.mxu0 %v441
  %733 = vmatprep.subr.mxu0 0.0
  %734 = vmatpush2.msra.mxu0 0.0
  %735 = vmatprep.subr.mxu0 0.0
  %736 = vmatpush2.msra.mxu0 0.0
  %737 = vmatprep.subr.mxu0 0.0
  %738 = vmatpush2.msra.mxu0 0.0
  %739 = vmatprep.subr.mxu0 0.0
  %740 = vmatpush2.msra.mxu0 0.0
  %741 = vmatprep.subr.mxu0 0.0
  %742 = vmatpush2.msra.mxu0 0.0
  %743 = vmatprep.subr.mxu0 0.0
  %744 = vmatpush2.msra.mxu0 0.0
  %745 = vmatprep.subr.mxu0 0.0
  %746 = vmatpush2.msra.mxu0 0.0
  %747 = vmatprep.subr.mxu0 0.0
  %748 = vmatpush2.msra.mxu0 0.0
  %749 = vmatprep.subr.mxu0 0.0
  %750 = vmatpush2.msra.mxu0 0.0
  %751 = vmatprep.subr.mxu0 0.0
  %752 = vmatpush2.msra.mxu0 0.0
  %753 = vmatprep.subr.mxu0 0.0
  %754 = vmatpush2.msra.mxu0 0.0
  %755 = vmatprep.subr.mxu0 0.0
  %756 = vmatpush2.msra.mxu0 0.0
  %757 = vmatprep.subr.mxu0 0.0
  %758 = vmatpush2.msra.mxu0 0.0
  %759 = vmatprep.subr.mxu0 0.0
  %760 = vmatpush2.msra.mxu0 0.0
  %761 = vmatprep.subr.mxu0 0.0
  %762 = vmatpush2.msra.mxu0 0.0
  %763 = vmatprep.subr.mxu0 0.0
  %764 = vmatpush2.msra.mxu0 0.0
  %765 = vmatprep.mubr.f32.mxu0 0.0
  %766 = vmatmul.mubr.f32.gmra.mxu0 %v697
  %v767 = vpop.f32.mrf.mxu0
  %v768 = vadd.f32 0.0, %v767
  %v769 = vpop.f32.mrf.mxu0
  %v770 = vadd.f32 0.0, %v769
  %771 = vdwg.mxu0
  %772 = vmatprep.subr.mxu0 %v504
  %773 = vmatpush1.msra.mxu0 %v503
  %774 = vmatprep.subr.mxu0 %v500
  %775 = vmatpush1.msra.mxu0 %v499
  %776 = vmatprep.subr.mxu0 %v496
  %777 = vmatpush1.msra.mxu0 %v495
  %778 = vmatprep.subr.mxu0 %v492
  %779 = vmatpush1.msra.mxu0 %v491
  %780 = vmatprep.subr.mxu0 %v488
  %781 = vmatpush1.msra.mxu0 %v487
  %782 = vmatprep.subr.mxu0 %v484
  %783 = vmatpush1.msra.mxu0 %v483
  %784 = vmatprep.subr.mxu0 %v480
  %785 = vmatpush1.msra.mxu0 %v479
  %786 = vmatprep.subr.mxu0 %v476
  %787 = vmatpush1.msra.mxu0 %v475
  %788 = vmatprep.subr.mxu0 %v472
  %789 = vmatpush1.msra.mxu0 %v471
  %790 = vmatprep.subr.mxu0 %v468
  %791 = vmatpush1.msra.mxu0 %v467
  %792 = vmatprep.subr.mxu0 %v464
  %793 = vmatpush1.msra.mxu0 %v463
  %794 = vmatprep.subr.mxu0 %v460
  %795 = vmatpush1.msra.mxu0 %v459
  %796 = vmatprep.subr.mxu0 %v456
  %797 = vmatpush1.msra.mxu0 %v455
  %798 = vmatprep.subr.mxu0 %v452
  %799 = vmatpush1.msra.mxu0 %v451
  %800 = vmatprep.subr.mxu0 %v448
  %801 = vmatpush1.msra.mxu0 %v447
  %802 = vmatprep.subr.mxu0 %v444
  %803 = vmatpush1.msra.mxu0 %v443
  %804 = vmatprep.subr.mxu0 0.0
  %805 = vmatpush2.msra.mxu0 0.0
  %806 = vmatprep.subr.mxu0 0.0
  %807 = vmatpush2.msra.mxu0 0.0
  %808 = vmatprep.subr.mxu0 0.0
  %809 = vmatpush2.msra.mxu0 0.0
  %810 = vmatprep.subr.mxu0 0.0
  %811 = vmatpush2.msra.mxu0 0.0
  %812 = vmatprep.subr.mxu0 0.0
  %813 = vmatpush2.msra.mxu0 0.0
  %814 = vmatprep.subr.mxu0 0.0
  %815 = vmatpush2.msra.mxu0 0.0
  %816 = vmatprep.subr.mxu0 0.0
  %817 = vmatpush2.msra.mxu0 0.0
  %818 = vmatprep.subr.mxu0 0.0
  %819 = vmatpush2.msra.mxu0 0.0
  %820 = vmatprep.subr.mxu0 0.0
  %821 = vmatpush2.msra.mxu0 0.0
  %822 = vmatprep.subr.mxu0 0.0
  %823 = vmatpush2.msra.mxu0 0.0
  %824 = vmatprep.subr.mxu0 0.0
  %825 = vmatpush2.msra.mxu0 0.0
  %826 = vmatprep.subr.mxu0 0.0
  %827 = vmatpush2.msra.mxu0 0.0
  %828 = vmatprep.subr.mxu0 0.0
  %829 = vmatpush2.msra.mxu0 0.0
  %830 = vmatprep.subr.mxu0 0.0
  %831 = vmatpush2.msra.mxu0 0.0
  %832 = vmatprep.subr.mxu0 0.0
  %833 = vmatpush2.msra.mxu0 0.0
  %834 = vmatprep.subr.mxu0 0.0
  %835 = vmatpush2.msra.mxu0 0.0
  %836 = vmatprep.mubr.f32.mxu0 0.0
  %837 = vmatmul.mubr.f32.gmra.mxu0 %v697
  %v838 = vpop.f32.mrf.mxu0
  %v839 = vadd.f32 0.0, %v838
  %v840 = vpop.f32.mrf.mxu0
  %v841 = vadd.f32 0.0, %v840
  %842 = vdwg.mxu0
  %v847 = vcombine.low %v768, %v770
  %v848 = vcombine.low %v839, %v841
  %v850 = vunpack.c.l.s4 1966171168
  %v851 = vunpack.c.0.s8 %v850
  %v852 = vlaneseq
  %v853 = vshrl.u32 %v852, 7
  %v854 = vsub.s32 %v851, %v853
  %v855 = vrot.slane %v847, %v854
  %v857 = vunpack.c.l.s4 1966171168
  %v858 = vunpack.c.0.s8 %v857
  %v859 = vlaneseq
  %v860 = vshrl.u32 %v859, 7
  %v861 = vsub.s32 %v858, %v860
  %v862 = vrot.slane %v848, %v861
  %v863 = vcombine.low %v855, %v862
  %v865 = vunpack.c.l.s4 1966171168
  %v866 = vunpack.c.0.s8 %v865
  %v867 = vlaneseq
  %v868 = vshrl.u32 %v867, 7
  %v869 = vsub.s32 %v866, %v868
  %v870 = vrot.slane %v863, %v869
  %v872 = vadd.f32 %v700, %v870
  %v873 = vxor.u32 %v872, 2147483648
  %v874 = vmul.f32 %v873, 1.442695
  %v875 = vpow.pop %v874
  %v876 = vadd.f32 %v875, 1.0
  %v877 = vrcp.pop %v876
  %v878 = vmul.f32 1.0, %v877
  %v880 = vrot.slane %v872, 3
  %v882 = vtanh.pop %v880
  %v884 = vrot.slane %v878, 1
  %v886 = vmul.f32 %v884, %v693
  %v887 = vmul.f32 %v878, %v882
  %v888 = vadd.f32 %v886, %v887
  %v889 = vtanh.pop %v888
  %v890 = vrot.slane %v878, 2
  %v892 = vmul.f32 %v890, %v889
  %893 = vst [vmem:[#allocation3 + $0x1] sm:$0x1] %v892
  %s894 = scalar_lea.vmem [#allocation2], 2
  %v895 = vld [vmem:[%s894] ss:$8 sm:$0xf]
  %896 = vmatprep.subr.mxu0 %v502
  %897 = vmatpush1.msra.mxu0 %v501
  %898 = vmatprep.subr.mxu0 %v498
  %899 = vmatpush1.msra.mxu0 %v497
  %900 = vmatprep.subr.mxu0 %v494
  %901 = vmatpush1.msra.mxu0 %v493
  %902 = vmatprep.subr.mxu0 %v490
  %903 = vmatpush1.msra.mxu0 %v489
  %904 = vmatprep.subr.mxu0 %v486
  %905 = vmatpush1.msra.mxu0 %v485
  %906 = vmatprep.subr.mxu0 %v482
  %907 = vmatpush1.msra.mxu0 %v481
  %908 = vmatprep.subr.mxu0 %v478
  %909 = vmatpush1.msra.mxu0 %v477
  %910 = vmatprep.subr.mxu0 %v474
  %911 = vmatpush1.msra.mxu0 %v473
  %912 = vmatprep.subr.mxu0 %v470
  %913 = vmatpush1.msra.mxu0 %v469
  %914 = vmatprep.subr.mxu0 %v466
  %915 = vmatpush1.msra.mxu0 %v465
  %916 = vmatprep.subr.mxu0 %v462
  %917 = vmatpush1.msra.mxu0 %v461
  %918 = vmatprep.subr.mxu0 %v458
  %919 = vmatpush1.msra.mxu0 %v457
  %920 = vmatprep.subr.mxu0 %v454
  %921 = vmatpush1.msra.mxu0 %v453
  %922 = vmatprep.subr.mxu0 %v450
  %923 = vmatpush1.msra.mxu0 %v449
  %924 = vmatprep.subr.mxu0 %v446
  %925 = vmatpush1.msra.mxu0 %v445
  %926 = vmatprep.subr.mxu0 %v442
  %927 = vmatpush1.msra.mxu0 %v441
  %928 = vmatprep.subr.mxu0 0.0
  %929 = vmatpush2.msra.mxu0 0.0
  %930 = vmatprep.subr.mxu0 0.0
  %931 = vmatpush2.msra.mxu0 0.0
  %932 = vmatprep.subr.mxu0 0.0
  %933 = vmatpush2.msra.mxu0 0.0
  %934 = vmatprep.subr.mxu0 0.0
  %935 = vmatpush2.msra.mxu0 0.0
  %936 = vmatprep.subr.mxu0 0.0
  %937 = vmatpush2.msra.mxu0 0.0
  %938 = vmatprep.subr.mxu0 0.0
  %939 = vmatpush2.msra.mxu0 0.0
  %940 = vmatprep.subr.mxu0 0.0
  %941 = vmatpush2.msra.mxu0 0.0
  %942 = vmatprep.subr.mxu0 0.0
  %943 = vmatpush2.msra.mxu0 0.0
  %944 = vmatprep.subr.mxu0 0.0
  %945 = vmatpush2.msra.mxu0 0.0
  %946 = vmatprep.subr.mxu0 0.0
  %947 = vmatpush2.msra.mxu0 0.0
  %948 = vmatprep.subr.mxu0 0.0
  %949 = vmatpush2.msra.mxu0 0.0
  %950 = vmatprep.subr.mxu0 0.0
  %951 = vmatpush2.msra.mxu0 0.0
  %952 = vmatprep.subr.mxu0 0.0
  %953 = vmatpush2.msra.mxu0 0.0
  %954 = vmatprep.subr.mxu0 0.0
  %955 = vmatpush2.msra.mxu0 0.0
  %956 = vmatprep.subr.mxu0 0.0
  %957 = vmatpush2.msra.mxu0 0.0
  %958 = vmatprep.subr.mxu0 0.0
  %959 = vmatpush2.msra.mxu0 0.0
  %960 = vmatprep.mubr.f32.mxu0 0.0
  %961 = vmatmul.mubr.f32.gmra.mxu0 %v892
  %v962 = vpop.f32.mrf.mxu0
  %v963 = vadd.f32 0.0, %v962
  %v964 = vpop.f32.mrf.mxu0
  %v965 = vadd.f32 0.0, %v964
  %966 = vdwg.mxu0
  %967 = vmatprep.subr.mxu0 %v504
  %968 = vmatpush1.msra.mxu0 %v503
  %969 = vmatprep.subr.mxu0 %v500
  %970 = vmatpush1.msra.mxu0 %v499
  %971 = vmatprep.subr.mxu0 %v496
  %972 = vmatpush1.msra.mxu0 %v495
  %973 = vmatprep.subr.mxu0 %v492
  %974 = vmatpush1.msra.mxu0 %v491
  %975 = vmatprep.subr.mxu0 %v488
  %976 = vmatpush1.msra.mxu0 %v487
  %977 = vmatprep.subr.mxu0 %v484
  %978 = vmatpush1.msra.mxu0 %v483
  %979 = vmatprep.subr.mxu0 %v480
  %980 = vmatpush1.msra.mxu0 %v479
  %981 = vmatprep.subr.mxu0 %v476
  %982 = vmatpush1.msra.mxu0 %v475
  %983 = vmatprep.subr.mxu0 %v472
  %984 = vmatpush1.msra.mxu0 %v471
  %985 = vmatprep.subr.mxu0 %v468
  %986 = vmatpush1.msra.mxu0 %v467
  %987 = vmatprep.subr.mxu0 %v464
  %988 = vmatpush1.msra.mxu0 %v463
  %989 = vmatprep.subr.mxu0 %v460
  %990 = vmatpush1.msra.mxu0 %v459
  %991 = vmatprep.subr.mxu0 %v456
  %992 = vmatpush1.msra.mxu0 %v455
  %993 = vmatprep.subr.mxu0 %v452
  %994 = vmatpush1.msra.mxu0 %v451
  %995 = vmatprep.subr.mxu0 %v448
  %996 = vmatpush1.msra.mxu0 %v447
  %997 = vmatprep.subr.mxu0 %v444
  %998 = vmatpush1.msra.mxu0 %v443
  %999 = vmatprep.subr.mxu0 0.0
  %1000 = vmatpush2.msra.mxu0 0.0
  %1001 = vmatprep.subr.mxu0 0.0
  %1002 = vmatpush2.msra.mxu0 0.0
  %1003 = vmatprep.subr.mxu0 0.0
  %1004 = vmatpush2.msra.mxu0 0.0
  %1005 = vmatprep.subr.mxu0 0.0
  %1006 = vmatpush2.msra.mxu0 0.0
  %1007 = vmatprep.subr.mxu0 0.0
  %1008 = vmatpush2.msra.mxu0 0.0
  %1009 = vmatprep.subr.mxu0 0.0
  %1010 = vmatpush2.msra.mxu0 0.0
  %1011 = vmatprep.subr.mxu0 0.0
  %1012 = vmatpush2.msra.mxu0 0.0
  %1013 = vmatprep.subr.mxu0 0.0
  %1014 = vmatpush2.msra.mxu0 0.0
  %1015 = vmatprep.subr.mxu0 0.0
  %1016 = vmatpush2.msra.mxu0 0.0
  %1017 = vmatprep.subr.mxu0 0.0
  %1018 = vmatpush2.msra.mxu0 0.0
  %1019 = vmatprep.subr.mxu0 0.0
  %1020 = vmatpush2.msra.mxu0 0.0
  %1021 = vmatprep.subr.mxu0 0.0
  %1022 = vmatpush2.msra.mxu0 0.0
  %1023 = vmatprep.subr.mxu0 0.0
  %1024 = vmatpush2.msra.mxu0 0.0
  %1025 = vmatprep.subr.mxu0 0.0
  %1026 = vmatpush2.msra.mxu0 0.0
  %1027 = vmatprep.subr.mxu0 0.0
  %1028 = vmatpush2.msra.mxu0 0.0
  %1029 = vmatprep.subr.mxu0 0.0
  %1030 = vmatpush2.msra.mxu0 0.0
  %1031 = vmatprep.mubr.f32.mxu0 0.0
  %1032 = vmatmul.mubr.f32.gmra.mxu0 %v892
  %v1033 = vpop.f32.mrf.mxu0
  %v1034 = vadd.f32 0.0, %v1033
  %v1035 = vpop.f32.mrf.mxu0
  %v1036 = vadd.f32 0.0, %v1035
  %1037 = vdwg.mxu0
  %v1042 = vcombine.low %v963, %v965
  %v1043 = vcombine.low %v1034, %v1036
  %v1045 = vunpack.c.l.s4 1966171168
  %v1046 = vunpack.c.0.s8 %v1045
  %v1047 = vlaneseq
  %v1048 = vshrl.u32 %v1047, 7
  %v1049 = vsub.s32 %v1046, %v1048
  %v1050 = vrot.slane %v1042, %v1049
  %v1052 = vunpack.c.l.s4 1966171168
  %v1053 = vunpack.c.0.s8 %v1052
  %v1054 = vlaneseq
  %v1055 = vshrl.u32 %v1054, 7
  %v1056 = vsub.s32 %v1053, %v1055
  %v1057 = vrot.slane %v1043, %v1056
  %v1058 = vcombine.low %v1050, %v1057
  %v1060 = vunpack.c.l.s4 1966171168
  %v1061 = vunpack.c.0.s8 %v1060
  %v1062 = vlaneseq
  %v1063 = vshrl.u32 %v1062, 7
  %v1064 = vsub.s32 %v1061, %v1063
  %v1065 = vrot.slane %v1058, %v1064
  %v1067 = vadd.f32 %v895, %v1065
  %v1068 = vxor.u32 %v1067, 2147483648
  %v1069 = vmul.f32 %v1068, 1.442695
  %v1070 = vpow.pop %v1069
  %v1071 = vadd.f32 %v1070, 1.0
  %v1072 = vrcp.pop %v1071
  %v1073 = vmul.f32 1.0, %v1072
  %v1075 = vrot.slane %v1067, 3
  %v1077 = vtanh.pop %v1075
  %v1079 = vrot.slane %v1073, 1
  %v1081 = vmul.f32 %v1079, %v888
  %v1082 = vmul.f32 %v1073, %v1077
  %v1083 = vadd.f32 %v1081, %v1082
  %v1084 = vtanh.pop %v1083
  %v1085 = vrot.slane %v1073, 2
  %v1087 = vmul.f32 %v1085, %v1084
  %1088 = vst [vmem:[#allocation3 + $0x2] sm:$0x1] %v1087
  %s1089 = scalar_lea.vmem [#allocation2], 3
  %v1090 = vld [vmem:[%s1089] ss:$8 sm:$0xf]
  %1091 = vmatprep.subr.mxu0 %v502
  %1092 = vmatpush1.msra.mxu0 %v501
  %1093 = vmatprep.subr.mxu0 %v498
  %1094 = vmatpush1.msra.mxu0 %v497
  %1095 = vmatprep.subr.mxu0 %v494
  %1096 = vmatpush1.msra.mxu0 %v493
  %1097 = vmatprep.subr.mxu0 %v490
  %1098 = vmatpush1.msra.mxu0 %v489
  %1099 = vmatprep.subr.mxu0 %v486
  %1100 = vmatpush1.msra.mxu0 %v485
  %1101 = vmatprep.subr.mxu0 %v482
  %1102 = vmatpush1.msra.mxu0 %v481
  %1103 = vmatprep.subr.mxu0 %v478
  %1104 = vmatpush1.msra.mxu0 %v477
  %1105 = vmatprep.subr.mxu0 %v474
  %1106 = vmatpush1.msra.mxu0 %v473
  %1107 = vmatprep.subr.mxu0 %v470
  %1108 = vmatpush1.msra.mxu0 %v469
  %1109 = vmatprep.subr.mxu0 %v466
  %1110 = vmatpush1.msra.mxu0 %v465
  %1111 = vmatprep.subr.mxu0 %v462
  %1112 = vmatpush1.msra.mxu0 %v461
  %1113 = vmatprep.subr.mxu0 %v458
  %1114 = vmatpush1.msra.mxu0 %v457
  %1115 = vmatprep.subr.mxu0 %v454
  %1116 = vmatpush1.msra.mxu0 %v453
  %1117 = vmatprep.subr.mxu0 %v450
  %1118 = vmatpush1.msra.mxu0 %v449
  %1119 = vmatprep.subr.mxu0 %v446
  %1120 = vmatpush1.msra.mxu0 %v445
  %1121 = vmatprep.subr.mxu0 %v442
  %1122 = vmatpush1.msra.mxu0 %v441
  %1123 = vmatprep.subr.mxu0 0.0
  %1124 = vmatpush2.msra.mxu0 0.0
  %1125 = vmatprep.subr.mxu0 0.0
  %1126 = vmatpush2.msra.mxu0 0.0
  %1127 = vmatprep.subr.mxu0 0.0
  %1128 = vmatpush2.msra.mxu0 0.0
  %1129 = vmatprep.subr.mxu0 0.0
  %1130 = vmatpush2.msra.mxu0 0.0
  %1131 = vmatprep.subr.mxu0 0.0
  %1132 = vmatpush2.msra.mxu0 0.0
  %1133 = vmatprep.subr.mxu0 0.0
  %1134 = vmatpush2.msra.mxu0 0.0
  %1135 = vmatprep.subr.mxu0 0.0
  %1136 = vmatpush2.msra.mxu0 0.0
  %1137 = vmatprep.subr.mxu0 0.0
  %1138 = vmatpush2.msra.mxu0 0.0
  %1139 = vmatprep.subr.mxu0 0.0
  %1140 = vmatpush2.msra.mxu0 0.0
  %1141 = vmatprep.subr.mxu0 0.0
  %1142 = vmatpush2.msra.mxu0 0.0
  %1143 = vmatprep.subr.mxu0 0.0
  %1144 = vmatpush2.msra.mxu0 0.0
  %1145 = vmatprep.subr.mxu0 0.0
  %1146 = vmatpush2.msra.mxu0 0.0
  %1147 = vmatprep.subr.mxu0 0.0
  %1148 = vmatpush2.msra.mxu0 0.0
  %1149 = vmatprep.subr.mxu0 0.0
  %1150 = vmatpush2.msra.mxu0 0.0
  %1151 = vmatprep.subr.mxu0 0.0
  %1152 = vmatpush2.msra.mxu0 0.0
  %1153 = vmatprep.subr.mxu0 0.0
  %1154 = vmatpush2.msra.mxu0 0.0
  %1155 = vmatprep.mubr.f32.mxu0 0.0
  %1156 = vmatmul.mubr.f32.gmra.mxu0 %v1087
  %v1157 = vpop.f32.mrf.mxu0
  %v1158 = vadd.f32 0.0, %v1157
  %v1159 = vpop.f32.mrf.mxu0
  %v1160 = vadd.f32 0.0, %v1159
  %1161 = vdwg.mxu0
  %1162 = vmatprep.subr.mxu0 %v504
  %1163 = vmatpush1.msra.mxu0 %v503
  %1164 = vmatprep.subr.mxu0 %v500
  %1165 = vmatpush1.msra.mxu0 %v499
  %1166 = vmatprep.subr.mxu0 %v496
  %1167 = vmatpush1.msra.mxu0 %v495
  %1168 = vmatprep.subr.mxu0 %v492
  %1169 = vmatpush1.msra.mxu0 %v491
  %1170 = vmatprep.subr.mxu0 %v488
  %1171 = vmatpush1.msra.mxu0 %v487
  %1172 = vmatprep.subr.mxu0 %v484
  %1173 = vmatpush1.msra.mxu0 %v483
  %1174 = vmatprep.subr.mxu0 %v480
  %1175 = vmatpush1.msra.mxu0 %v479
  %1176 = vmatprep.subr.mxu0 %v476
  %1177 = vmatpush1.msra.mxu0 %v475
  %1178 = vmatprep.subr.mxu0 %v472
  %1179 = vmatpush1.msra.mxu0 %v471
  %1180 = vmatprep.subr.mxu0 %v468
  %1181 = vmatpush1.msra.mxu0 %v467
  %1182 = vmatprep.subr.mxu0 %v464
  %1183 = vmatpush1.msra.mxu0 %v463
  %1184 = vmatprep.subr.mxu0 %v460
  %1185 = vmatpush1.msra.mxu0 %v459
  %1186 = vmatprep.subr.mxu0 %v456
  %1187 = vmatpush1.msra.mxu0 %v455
  %1188 = vmatprep.subr.mxu0 %v452
  %1189 = vmatpush1.msra.mxu0 %v451
  %1190 = vmatprep.subr.mxu0 %v448
  %1191 = vmatpush1.msra.mxu0 %v447
  %1192 = vmatprep.subr.mxu0 %v444
  %1193 = vmatpush1.msra.mxu0 %v443
  %1194 = vmatprep.subr.mxu0 0.0
  %1195 = vmatpush2.msra.mxu0 0.0
  %1196 = vmatprep.subr.mxu0 0.0
  %1197 = vmatpush2.msra.mxu0 0.0
  %1198 = vmatprep.subr.mxu0 0.0
  %1199 = vmatpush2.msra.mxu0 0.0
  %1200 = vmatprep.subr.mxu0 0.0
  %1201 = vmatpush2.msra.mxu0 0.0
  %1202 = vmatprep.subr.mxu0 0.0
  %1203 = vmatpush2.msra.mxu0 0.0
  %1204 = vmatprep.subr.mxu0 0.0
  %1205 = vmatpush2.msra.mxu0 0.0
  %1206 = vmatprep.subr.mxu0 0.0
  %1207 = vmatpush2.msra.mxu0 0.0
  %1208 = vmatprep.subr.mxu0 0.0
  %1209 = vmatpush2.msra.mxu0 0.0
  %1210 = vmatprep.subr.mxu0 0.0
  %1211 = vmatpush2.msra.mxu0 0.0
  %1212 = vmatprep.subr.mxu0 0.0
  %1213 = vmatpush2.msra.mxu0 0.0
  %1214 = vmatprep.subr.mxu0 0.0
  %1215 = vmatpush2.msra.mxu0 0.0
  %1216 = vmatprep.subr.mxu0 0.0
  %1217 = vmatpush2.msra.mxu0 0.0
  %1218 = vmatprep.subr.mxu0 0.0
  %1219 = vmatpush2.msra.mxu0 0.0
  %1220 = vmatprep.subr.mxu0 0.0
  %1221 = vmatpush2.msra.mxu0 0.0
  %1222 = vmatprep.subr.mxu0 0.0
  %1223 = vmatpush2.msra.mxu0 0.0
  %1224 = vmatprep.subr.mxu0 0.0
  %1225 = vmatpush2.msra.mxu0 0.0
  %1226 = vmatprep.mubr.f32.mxu0 0.0
  %1227 = vmatmul.mubr.f32.gmra.mxu0 %v1087
  %v1228 = vpop.f32.mrf.mxu0
  %v1229 = vadd.f32 0.0, %v1228
  %v1230 = vpop.f32.mrf.mxu0
  %v1231 = vadd.f32 0.0, %v1230
  %1232 = vdwg.mxu0
  %v1237 = vcombine.low %v1158, %v1160
  %v1238 = vcombine.low %v1229, %v1231
  %v1240 = vunpack.c.l.s4 1966171168
  %v1241 = vunpack.c.0.s8 %v1240
  %v1242 = vlaneseq
  %v1243 = vshrl.u32 %v1242, 7
  %v1244 = vsub.s32 %v1241, %v1243
  %v1245 = vrot.slane %v1237, %v1244
  %v1247 = vunpack.c.l.s4 1966171168
  %v1248 = vunpack.c.0.s8 %v1247
  %v1249 = vlaneseq
  %v1250 = vshrl.u32 %v1249, 7
  %v1251 = vsub.s32 %v1248, %v1250
  %v1252 = vrot.slane %v1238, %v1251
  %v1253 = vcombine.low %v1245, %v1252
  %v1255 = vunpack.c.l.s4 1966171168
  %v1256 = vunpack.c.0.s8 %v1255
  %v1257 = vlaneseq
  %v1258 = vshrl.u32 %v1257, 7
  %v1259 = vsub.s32 %v1256, %v1258
  %v1260 = vrot.slane %v1253, %v1259
  %v1262 = vadd.f32 %v1090, %v1260
  %v1263 = vxor.u32 %v1262, 2147483648
  %v1264 = vmul.f32 %v1263, 1.442695
  %v1265 = vpow.pop %v1264
  %v1266 = vadd.f32 %v1265, 1.0
  %v1267 = vrcp.pop %v1266
  %v1268 = vmul.f32 1.0, %v1267
  %v1270 = vrot.slane %v1262, 3
  %v1272 = vtanh.pop %v1270
  %v1274 = vrot.slane %v1268, 1
  %v1276 = vmul.f32 %v1274, %v1083
  %v1277 = vmul.f32 %v1268, %v1272
  %v1278 = vadd.f32 %v1276, %v1277
  %v1279 = vtanh.pop %v1278
  %v1280 = vrot.slane %v1268, 2
  %v1282 = vmul.f32 %v1280, %v1279
  %1283 = vst [vmem:[#allocation3 + $0x3] sm:$0x1] %v1282
  %s1284 = scalar_lea.vmem [#allocation2], 4
  %v1285 = vld [vmem:[%s1284] ss:$8 sm:$0xf]
  %1286 = vmatprep.subr.mxu0 %v502
  %1287 = vmatpush1.msra.mxu0 %v501
  %1288 = vmatprep.subr.mxu0 %v498
  %1289 = vmatpush1.msra.mxu0 %v497
  %1290 = vmatprep.subr.mxu0 %v494
  %1291 = vmatpush1.msra.mxu0 %v493
  %1292 = vmatprep.subr.mxu0 %v490
  %1293 = vmatpush1.msra.mxu0 %v489
  %1294 = vmatprep.subr.mxu0 %v486
  %1295 = vmatpush1.msra.mxu0 %v485
  %1296 = vmatprep.subr.mxu0 %v482
  %1297 = vmatpush1.msra.mxu0 %v481
  %1298 = vmatprep.subr.mxu0 %v478
  %1299 = vmatpush1.msra.mxu0 %v477
  %1300 = vmatprep.subr.mxu0 %v474
  %1301 = vmatpush1.msra.mxu0 %v473
  %1302 = vmatprep.subr.mxu0 %v470
  %1303 = vmatpush1.msra.mxu0 %v469
  %1304 = vmatprep.subr.mxu0 %v466
  %1305 = vmatpush1.msra.mxu0 %v465
  %1306 = vmatprep.subr.mxu0 %v462
  %1307 = vmatpush1.msra.mxu0 %v461
  %1308 = vmatprep.subr.mxu0 %v458
  %1309 = vmatpush1.msra.mxu0 %v457
  %1310 = vmatprep.subr.mxu0 %v454
  %1311 = vmatpush1.msra.mxu0 %v453
  %1312 = vmatprep.subr.mxu0 %v450
  %1313 = vmatpush1.msra.mxu0 %v449
  %1314 = vmatprep.subr.mxu0 %v446
  %1315 = vmatpush1.msra.mxu0 %v445
  %1316 = vmatprep.subr.mxu0 %v442
  %1317 = vmatpush1.msra.mxu0 %v441
  %1318 = vmatprep.subr.mxu0 0.0
  %1319 = vmatpush2.msra.mxu0 0.0
  %1320 = vmatprep.subr.mxu0 0.0
  %1321 = vmatpush2.msra.mxu0 0.0
  %1322 = vmatprep.subr.mxu0 0.0
  %1323 = vmatpush2.msra.mxu0 0.0
  %1324 = vmatprep.subr.mxu0 0.0
  %1325 = vmatpush2.msra.mxu0 0.0
  %1326 = vmatprep.subr.mxu0 0.0
  %1327 = vmatpush2.msra.mxu0 0.0
  %1328 = vmatprep.subr.mxu0 0.0
  %1329 = vmatpush2.msra.mxu0 0.0
  %1330 = vmatprep.subr.mxu0 0.0
  %1331 = vmatpush2.msra.mxu0 0.0
  %1332 = vmatprep.subr.mxu0 0.0
  %1333 = vmatpush2.msra.mxu0 0.0
  %1334 = vmatprep.subr.mxu0 0.0
  %1335 = vmatpush2.msra.mxu0 0.0
  %1336 = vmatprep.subr.mxu0 0.0
  %1337 = vmatpush2.msra.mxu0 0.0
  %1338 = vmatprep.subr.mxu0 0.0
  %1339 = vmatpush2.msra.mxu0 0.0
  %1340 = vmatprep.subr.mxu0 0.0
  %1341 = vmatpush2.msra.mxu0 0.0
  %1342 = vmatprep.subr.mxu0 0.0
  %1343 = vmatpush2.msra.mxu0 0.0
  %1344 = vmatprep.subr.mxu0 0.0
  %1345 = vmatpush2.msra.mxu0 0.0
  %1346 = vmatprep.subr.mxu0 0.0
  %1347 = vmatpush2.msra.mxu0 0.0
  %1348 = vmatprep.subr.mxu0 0.0
  %1349 = vmatpush2.msra.mxu0 0.0
  %1350 = vmatprep.mubr.f32.mxu0 0.0
  %1351 = vmatmul.mubr.f32.gmra.mxu0 %v1282
  %v1352 = vpop.f32.mrf.mxu0
  %v1353 = vadd.f32 0.0, %v1352
  %v1354 = vpop.f32.mrf.mxu0
  %v1355 = vadd.f32 0.0, %v1354
  %1356 = vdwg.mxu0
  %1357 = vmatprep.subr.mxu0 %v504
  %1358 = vmatpush1.msra.mxu0 %v503
  %1359 = vmatprep.subr.mxu0 %v500
  %1360 = vmatpush1.msra.mxu0 %v499
  %1361 = vmatprep.subr.mxu0 %v496
  %1362 = vmatpush1.msra.mxu0 %v495
  %1363 = vmatprep.subr.mxu0 %v492
  %1364 = vmatpush1.msra.mxu0 %v491
  %1365 = vmatprep.subr.mxu0 %v488
  %1366 = vmatpush1.msra.mxu0 %v487
  %1367 = vmatprep.subr.mxu0 %v484
  %1368 = vmatpush1.msra.mxu0 %v483
  %1369 = vmatprep.subr.mxu0 %v480
  %1370 = vmatpush1.msra.mxu0 %v479
  %1371 = vmatprep.subr.mxu0 %v476
  %1372 = vmatpush1.msra.mxu0 %v475
  %1373 = vmatprep.subr.mxu0 %v472
  %1374 = vmatpush1.msra.mxu0 %v471
  %1375 = vmatprep.subr.mxu0 %v468
  %1376 = vmatpush1.msra.mxu0 %v467
  %1377 = vmatprep.subr.mxu0 %v464
  %1378 = vmatpush1.msra.mxu0 %v463
  %1379 = vmatprep.subr.mxu0 %v460
  %1380 = vmatpush1.msra.mxu0 %v459
  %1381 = vmatprep.subr.mxu0 %v456
  %1382 = vmatpush1.msra.mxu0 %v455
  %1383 = vmatprep.subr.mxu0 %v452
  %1384 = vmatpush1.msra.mxu0 %v451
  %1385 = vmatprep.subr.mxu0 %v448
  %1386 = vmatpush1.msra.mxu0 %v447
  %1387 = vmatprep.subr.mxu0 %v444
  %1388 = vmatpush1.msra.mxu0 %v443
  %1389 = vmatprep.subr.mxu0 0.0
  %1390 = vmatpush2.msra.mxu0 0.0
  %1391 = vmatprep.subr.mxu0 0.0
  %1392 = vmatpush2.msra.mxu0 0.0
  %1393 = vmatprep.subr.mxu0 0.0
  %1394 = vmatpush2.msra.mxu0 0.0
  %1395 = vmatprep.subr.mxu0 0.0
  %1396 = vmatpush2.msra.mxu0 0.0
  %1397 = vmatprep.subr.mxu0 0.0
  %1398 = vmatpush2.msra.mxu0 0.0
  %1399 = vmatprep.subr.mxu0 0.0
  %1400 = vmatpush2.msra.mxu0 0.0
  %1401 = vmatprep.subr.mxu0 0.0
  %1402 = vmatpush2.msra.mxu0 0.0
  %1403 = vmatprep.subr.mxu0 0.0
  %1404 = vmatpush2.msra.mxu0 0.0
  %1405 = vmatprep.subr.mxu0 0.0
  %1406 = vmatpush2.msra.mxu0 0.0
  %1407 = vmatprep.subr.mxu0 0.0
  %1408 = vmatpush2.msra.mxu0 0.0
  %1409 = vmatprep.subr.mxu0 0.0
  %1410 = vmatpush2.msra.mxu0 0.0
  %1411 = vmatprep.subr.mxu0 0.0
  %1412 = vmatpush2.msra.mxu0 0.0
  %1413 = vmatprep.subr.mxu0 0.0
  %1414 = vmatpush2.msra.mxu0 0.0
  %1415 = vmatprep.subr.mxu0 0.0
  %1416 = vmatpush2.msra.mxu0 0.0
  %1417 = vmatprep.subr.mxu0 0.0
  %1418 = vmatpush2.msra.mxu0 0.0
  %1419 = vmatprep.subr.mxu0 0.0
  %1420 = vmatpush2.msra.mxu0 0.0
  %1421 = vmatprep.mubr.f32.mxu0 0.0
  %1422 = vmatmul.mubr.f32.gmra.mxu0 %v1282
  %v1423 = vpop.f32.mrf.mxu0
  %v1424 = vadd.f32 0.0, %v1423
  %v1425 = vpop.f32.mrf.mxu0
  %v1426 = vadd.f32 0.0, %v1425
  %1427 = vdwg.mxu0
  %v1432 = vcombine.low %v1353, %v1355
  %v1433 = vcombine.low %v1424, %v1426
  %v1435 = vunpack.c.l.s4 1966171168
  %v1436 = vunpack.c.0.s8 %v1435
  %v1437 = vlaneseq
  %v1438 = vshrl.u32 %v1437, 7
  %v1439 = vsub.s32 %v1436, %v1438
  %v1440 = vrot.slane %v1432, %v1439
  %v1442 = vunpack.c.l.s4 1966171168
  %v1443 = vunpack.c.0.s8 %v1442
  %v1444 = vlaneseq
  %v1445 = vshrl.u32 %v1444, 7
  %v1446 = vsub.s32 %v1443, %v1445
  %v1447 = vrot.slane %v1433, %v1446
  %v1448 = vcombine.low %v1440, %v1447
  %v1450 = vunpack.c.l.s4 1966171168
  %v1451 = vunpack.c.0.s8 %v1450
  %v1452 = vlaneseq
  %v1453 = vshrl.u32 %v1452, 7
  %v1454 = vsub.s32 %v1451, %v1453
  %v1455 = vrot.slane %v1448, %v1454
  %v1457 = vadd.f32 %v1285, %v1455
  %v1458 = vxor.u32 %v1457, 2147483648
  %v1459 = vmul.f32 %v1458, 1.442695
  %v1460 = vpow.pop %v1459
  %v1461 = vadd.f32 %v1460, 1.0
  %v1462 = vrcp.pop %v1461
  %v1463 = vmul.f32 1.0, %v1462
  %v1465 = vrot.slane %v1457, 3
  %v1467 = vtanh.pop %v1465
  %v1469 = vrot.slane %v1463, 1
  %v1471 = vmul.f32 %v1469, %v1278
  %v1472 = vmul.f32 %v1463, %v1467
  %v1473 = vadd.f32 %v1471, %v1472
  %v1474 = vtanh.pop %v1473
  %v1475 = vrot.slane %v1463, 2
  %v1477 = vmul.f32 %v1475, %v1474
  %1478 = vst [vmem:[#allocation3 + $0x4] sm:$0x1] %v1477
  %s1479 = scalar_lea.vmem [#allocation2], 5
  %v1480 = vld [vmem:[%s1479] ss:$8 sm:$0xf]
  %1481 = vmatprep.subr.mxu0 %v502
  %1482 = vmatpush1.msra.mxu0 %v501
  %1483 = vmatprep.subr.mxu0 %v498
  %1484 = vmatpush1.msra.mxu0 %v497
  %1485 = vmatprep.subr.mxu0 %v494
  %1486 = vmatpush1.msra.mxu0 %v493
  %1487 = vmatprep.subr.mxu0 %v490
  %1488 = vmatpush1.msra.mxu0 %v489
  %1489 = vmatprep.subr.mxu0 %v486
  %1490 = vmatpush1.msra.mxu0 %v485
  %1491 = vmatprep.subr.mxu0 %v482
  %1492 = vmatpush1.msra.mxu0 %v481
  %1493 = vmatprep.subr.mxu0 %v478
  %1494 = vmatpush1.msra.mxu0 %v477
  %1495 = vmatprep.subr.mxu0 %v474
  %1496 = vmatpush1.msra.mxu0 %v473
  %1497 = vmatprep.subr.mxu0 %v470
  %1498 = vmatpush1.msra.mxu0 %v469
  %1499 = vmatprep.subr.mxu0 %v466
  %1500 = vmatpush1.msra.mxu0 %v465
  %1501 = vmatprep.subr.mxu0 %v462
  %1502 = vmatpush1.msra.mxu0 %v461
  %1503 = vmatprep.subr.mxu0 %v458
  %1504 = vmatpush1.msra.mxu0 %v457
  %1505 = vmatprep.subr.mxu0 %v454
  %1506 = vmatpush1.msra.mxu0 %v453
  %1507 = vmatprep.subr.mxu0 %v450
  %1508 = vmatpush1.msra.mxu0 %v449
  %1509 = vmatprep.subr.mxu0 %v446
  %1510 = vmatpush1.msra.mxu0 %v445
  %1511 = vmatprep.subr.mxu0 %v442
  %1512 = vmatpush1.msra.mxu0 %v441
  %1513 = vmatprep.subr.mxu0 0.0
  %1514 = vmatpush2.msra.mxu0 0.0
  %1515 = vmatprep.subr.mxu0 0.0
  %1516 = vmatpush2.msra.mxu0 0.0
  %1517 = vmatprep.subr.mxu0 0.0
  %1518 = vmatpush2.msra.mxu0 0.0
  %1519 = vmatprep.subr.mxu0 0.0
  %1520 = vmatpush2.msra.mxu0 0.0
  %1521 = vmatprep.subr.mxu0 0.0
  %1522 = vmatpush2.msra.mxu0 0.0
  %1523 = vmatprep.subr.mxu0 0.0
  %1524 = vmatpush2.msra.mxu0 0.0
  %1525 = vmatprep.subr.mxu0 0.0
  %1526 = vmatpush2.msra.mxu0 0.0
  %1527 = vmatprep.subr.mxu0 0.0
  %1528 = vmatpush2.msra.mxu0 0.0
  %1529 = vmatprep.subr.mxu0 0.0
  %1530 = vmatpush2.msra.mxu0 0.0
  %1531 = vmatprep.subr.mxu0 0.0
  %1532 = vmatpush2.msra.mxu0 0.0
  %1533 = vmatprep.subr.mxu0 0.0
  %1534 = vmatpush2.msra.mxu0 0.0
  %1535 = vmatprep.subr.mxu0 0.0
  %1536 = vmatpush2.msra.mxu0 0.0
  %1537 = vmatprep.subr.mxu0 0.0
  %1538 = vmatpush2.msra.mxu0 0.0
  %1539 = vmatprep.subr.mxu0 0.0
  %1540 = vmatpush2.msra.mxu0 0.0
  %1541 = vmatprep.subr.mxu0 0.0
  %1542 = vmatpush2.msra.mxu0 0.0
  %1543 = vmatprep.subr.mxu0 0.0
  %1544 = vmatpush2.msra.mxu0 0.0
  %1545 = vmatprep.mubr.f32.mxu0 0.0
  %1546 = vmatmul.mubr.f32.gmra.mxu0 %v1477
  %v1547 = vpop.f32.mrf.mxu0
  %v1548 = vadd.f32 0.0, %v1547
  %v1549 = vpop.f32.mrf.mxu0
  %v1550 = vadd.f32 0.0, %v1549
  %1551 = vdwg.mxu0
  %1552 = vmatprep.subr.mxu0 %v504
  %1553 = vmatpush1.msra.mxu0 %v503
  %1554 = vmatprep.subr.mxu0 %v500
  %1555 = vmatpush1.msra.mxu0 %v499
  %1556 = vmatprep.subr.mxu0 %v496
  %1557 = vmatpush1.msra.mxu0 %v495
  %1558 = vmatprep.subr.mxu0 %v492
  %1559 = vmatpush1.msra.mxu0 %v491
  %1560 = vmatprep.subr.mxu0 %v488
  %1561 = vmatpush1.msra.mxu0 %v487
  %1562 = vmatprep.subr.mxu0 %v484
  %1563 = vmatpush1.msra.mxu0 %v483
  %1564 = vmatprep.subr.mxu0 %v480
  %1565 = vmatpush1.msra.mxu0 %v479
  %1566 = vmatprep.subr.mxu0 %v476
  %1567 = vmatpush1.msra.mxu0 %v475
  %1568 = vmatprep.subr.mxu0 %v472
  %1569 = vmatpush1.msra.mxu0 %v471
  %1570 = vmatprep.subr.mxu0 %v468
  %1571 = vmatpush1.msra.mxu0 %v467
  %1572 = vmatprep.subr.mxu0 %v464
  %1573 = vmatpush1.msra.mxu0 %v463
  %1574 = vmatprep.subr.mxu0 %v460
  %1575 = vmatpush1.msra.mxu0 %v459
  %1576 = vmatprep.subr.mxu0 %v456
  %1577 = vmatpush1.msra.mxu0 %v455
  %1578 = vmatprep.subr.mxu0 %v452
  %1579 = vmatpush1.msra.mxu0 %v451
  %1580 = vmatprep.subr.mxu0 %v448
  %1581 = vmatpush1.msra.mxu0 %v447
  %1582 = vmatprep.subr.mxu0 %v444
  %1583 = vmatpush1.msra.mxu0 %v443
  %1584 = vmatprep.subr.mxu0 0.0
  %1585 = vmatpush2.msra.mxu0 0.0
  %1586 = vmatprep.subr.mxu0 0.0
  %1587 = vmatpush2.msra.mxu0 0.0
  %1588 = vmatprep.subr.mxu0 0.0
  %1589 = vmatpush2.msra.mxu0 0.0
  %1590 = vmatprep.subr.mxu0 0.0
  %1591 = vmatpush2.msra.mxu0 0.0
  %1592 = vmatprep.subr.mxu0 0.0
  %1593 = vmatpush2.msra.mxu0 0.0
  %1594 = vmatprep.subr.mxu0 0.0
  %1595 = vmatpush2.msra.mxu0 0.0
  %1596 = vmatprep.subr.mxu0 0.0
  %1597 = vmatpush2.msra.mxu0 0.0
  %1598 = vmatprep.subr.mxu0 0.0
  %1599 = vmatpush2.msra.mxu0 0.0
  %1600 = vmatprep.subr.mxu0 0.0
  %1601 = vmatpush2.msra.mxu0 0.0
  %1602 = vmatprep.subr.mxu0 0.0
  %1603 = vmatpush2.msra.mxu0 0.0
  %1604 = vmatprep.subr.mxu0 0.0
  %1605 = vmatpush2.msra.mxu0 0.0
  %1606 = vmatprep.subr.mxu0 0.0
  %1607 = vmatpush2.msra.mxu0 0.0
  %1608 = vmatprep.subr.mxu0 0.0
  %1609 = vmatpush2.msra.mxu0 0.0
  %1610 = vmatprep.subr.mxu0 0.0
  %1611 = vmatpush2.msra.mxu0 0.0
  %1612 = vmatprep.subr.mxu0 0.0
  %1613 = vmatpush2.msra.mxu0 0.0
  %1614 = vmatprep.subr.mxu0 0.0
  %1615 = vmatpush2.msra.mxu0 0.0
  %1616 = vmatprep.mubr.f32.mxu0 0.0
  %1617 = vmatmul.mubr.f32.gmra.mxu0 %v1477
  %v1618 = vpop.f32.mrf.mxu0
  %v1619 = vadd.f32 0.0, %v1618
  %v1620 = vpop.f32.mrf.mxu0
  %v1621 = vadd.f32 0.0, %v1620
  %1622 = vdwg.mxu0
  %v1627 = vcombine.low %v1548, %v1550
  %v1628 = vcombine.low %v1619, %v1621
  %v1630 = vunpack.c.l.s4 1966171168
  %v1631 = vunpack.c.0.s8 %v1630
  %v1632 = vlaneseq
  %v1633 = vshrl.u32 %v1632, 7
  %v1634 = vsub.s32 %v1631, %v1633
  %v1635 = vrot.slane %v1627, %v1634
  %v1637 = vunpack.c.l.s4 1966171168
  %v1638 = vunpack.c.0.s8 %v1637
  %v1639 = vlaneseq
  %v1640 = vshrl.u32 %v1639, 7
  %v1641 = vsub.s32 %v1638, %v1640
  %v1642 = vrot.slane %v1628, %v1641
  %v1643 = vcombine.low %v1635, %v1642
  %v1645 = vunpack.c.l.s4 1966171168
  %v1646 = vunpack.c.0.s8 %v1645
  %v1647 = vlaneseq
  %v1648 = vshrl.u32 %v1647, 7
  %v1649 = vsub.s32 %v1646, %v1648
  %v1650 = vrot.slane %v1643, %v1649
  %v1652 = vadd.f32 %v1480, %v1650
  %v1653 = vxor.u32 %v1652, 2147483648
  %v1654 = vmul.f32 %v1653, 1.442695
  %v1655 = vpow.pop %v1654
  %v1656 = vadd.f32 %v1655, 1.0
  %v1657 = vrcp.pop %v1656
  %v1658 = vmul.f32 1.0, %v1657
  %v1660 = vrot.slane %v1652, 3
  %v1662 = vtanh.pop %v1660
  %v1664 = vrot.slane %v1658, 1
  %v1666 = vmul.f32 %v1664, %v1473
  %v1667 = vmul.f32 %v1658, %v1662
  %v1668 = vadd.f32 %v1666, %v1667
  %v1669 = vtanh.pop %v1668
  %v1670 = vrot.slane %v1658, 2
  %v1672 = vmul.f32 %v1670, %v1669
  %1673 = vst [vmem:[#allocation3 + $0x5] sm:$0x1] %v1672
  %s1674 = scalar_lea.vmem [#allocation2], 6
  %v1675 = vld [vmem:[%s1674] ss:$8 sm:$0xf]
  %1676 = vmatprep.subr.mxu0 %v502
  %1677 = vmatpush1.msra.mxu0 %v501
  %1678 = vmatprep.subr.mxu0 %v498
  %1679 = vmatpush1.msra.mxu0 %v497
  %1680 = vmatprep.subr.mxu0 %v494
  %1681 = vmatpush1.msra.mxu0 %v493
  %1682 = vmatprep.subr.mxu0 %v490
  %1683 = vmatpush1.msra.mxu0 %v489
  %1684 = vmatprep.subr.mxu0 %v486
  %1685 = vmatpush1.msra.mxu0 %v485
  %1686 = vmatprep.subr.mxu0 %v482
  %1687 = vmatpush1.msra.mxu0 %v481
  %1688 = vmatprep.subr.mxu0 %v478
  %1689 = vmatpush1.msra.mxu0 %v477
  %1690 = vmatprep.subr.mxu0 %v474
  %1691 = vmatpush1.msra.mxu0 %v473
  %1692 = vmatprep.subr.mxu0 %v470
  %1693 = vmatpush1.msra.mxu0 %v469
  %1694 = vmatprep.subr.mxu0 %v466
  %1695 = vmatpush1.msra.mxu0 %v465
  %1696 = vmatprep.subr.mxu0 %v462
  %1697 = vmatpush1.msra.mxu0 %v461
  %1698 = vmatprep.subr.mxu0 %v458
  %1699 = vmatpush1.msra.mxu0 %v457
  %1700 = vmatprep.subr.mxu0 %v454
  %1701 = vmatpush1.msra.mxu0 %v453
  %1702 = vmatprep.subr.mxu0 %v450
  %1703 = vmatpush1.msra.mxu0 %v449
  %1704 = vmatprep.subr.mxu0 %v446
  %1705 = vmatpush1.msra.mxu0 %v445
  %1706 = vmatprep.subr.mxu0 %v442
  %1707 = vmatpush1.msra.mxu0 %v441
  %1708 = vmatprep.subr.mxu0 0.0
  %1709 = vmatpush2.msra.mxu0 0.0
  %1710 = vmatprep.subr.mxu0 0.0
  %1711 = vmatpush2.msra.mxu0 0.0
  %1712 = vmatprep.subr.mxu0 0.0
  %1713 = vmatpush2.msra.mxu0 0.0
  %1714 = vmatprep.subr.mxu0 0.0
  %1715 = vmatpush2.msra.mxu0 0.0
  %1716 = vmatprep.subr.mxu0 0.0
  %1717 = vmatpush2.msra.mxu0 0.0
  %1718 = vmatprep.subr.mxu0 0.0
  %1719 = vmatpush2.msra.mxu0 0.0
  %1720 = vmatprep.subr.mxu0 0.0
  %1721 = vmatpush2.msra.mxu0 0.0
  %1722 = vmatprep.subr.mxu0 0.0
  %1723 = vmatpush2.msra.mxu0 0.0
  %1724 = vmatprep.subr.mxu0 0.0
  %1725 = vmatpush2.msra.mxu0 0.0
  %1726 = vmatprep.subr.mxu0 0.0
  %1727 = vmatpush2.msra.mxu0 0.0
  %1728 = vmatprep.subr.mxu0 0.0
  %1729 = vmatpush2.msra.mxu0 0.0
  %1730 = vmatprep.subr.mxu0 0.0
  %1731 = vmatpush2.msra.mxu0 0.0
  %1732 = vmatprep.subr.mxu0 0.0
  %1733 = vmatpush2.msra.mxu0 0.0
  %1734 = vmatprep.subr.mxu0 0.0
  %1735 = vmatpush2.msra.mxu0 0.0
  %1736 = vmatprep.subr.mxu0 0.0
  %1737 = vmatpush2.msra.mxu0 0.0
  %1738 = vmatprep.subr.mxu0 0.0
  %1739 = vmatpush2.msra.mxu0 0.0
  %1740 = vmatprep.mubr.f32.mxu0 0.0
  %1741 = vmatmul.mubr.f32.gmra.mxu0 %v1672
  %v1742 = vpop.f32.mrf.mxu0
  %v1743 = vadd.f32 0.0, %v1742
  %v1744 = vpop.f32.mrf.mxu0
  %v1745 = vadd.f32 0.0, %v1744
  %1746 = vdwg.mxu0
  %1747 = vmatprep.subr.mxu0 %v504
  %1748 = vmatpush1.msra.mxu0 %v503
  %1749 = vmatprep.subr.mxu0 %v500
  %1750 = vmatpush1.msra.mxu0 %v499
  %1751 = vmatprep.subr.mxu0 %v496
  %1752 = vmatpush1.msra.mxu0 %v495
  %1753 = vmatprep.subr.mxu0 %v492
  %1754 = vmatpush1.msra.mxu0 %v491
  %1755 = vmatprep.subr.mxu0 %v488
  %1756 = vmatpush1.msra.mxu0 %v487
  %1757 = vmatprep.subr.mxu0 %v484
  %1758 = vmatpush1.msra.mxu0 %v483
  %1759 = vmatprep.subr.mxu0 %v480
  %1760 = vmatpush1.msra.mxu0 %v479
  %1761 = vmatprep.subr.mxu0 %v476
  %1762 = vmatpush1.msra.mxu0 %v475
  %1763 = vmatprep.subr.mxu0 %v472
  %1764 = vmatpush1.msra.mxu0 %v471
  %1765 = vmatprep.subr.mxu0 %v468
  %1766 = vmatpush1.msra.mxu0 %v467
  %1767 = vmatprep.subr.mxu0 %v464
  %1768 = vmatpush1.msra.mxu0 %v463
  %1769 = vmatprep.subr.mxu0 %v460
  %1770 = vmatpush1.msra.mxu0 %v459
  %1771 = vmatprep.subr.mxu0 %v456
  %1772 = vmatpush1.msra.mxu0 %v455
  %1773 = vmatprep.subr.mxu0 %v452
  %1774 = vmatpush1.msra.mxu0 %v451
  %1775 = vmatprep.subr.mxu0 %v448
  %1776 = vmatpush1.msra.mxu0 %v447
  %1777 = vmatprep.subr.mxu0 %v444
  %1778 = vmatpush1.msra.mxu0 %v443
  %1779 = vmatprep.subr.mxu0 0.0
  %1780 = vmatpush2.msra.mxu0 0.0
  %1781 = vmatprep.subr.mxu0 0.0
  %1782 = vmatpush2.msra.mxu0 0.0
  %1783 = vmatprep.subr.mxu0 0.0
  %1784 = vmatpush2.msra.mxu0 0.0
  %1785 = vmatprep.subr.mxu0 0.0
  %1786 = vmatpush2.msra.mxu0 0.0
  %1787 = vmatprep.subr.mxu0 0.0
  %1788 = vmatpush2.msra.mxu0 0.0
  %1789 = vmatprep.subr.mxu0 0.0
  %1790 = vmatpush2.msra.mxu0 0.0
  %1791 = vmatprep.subr.mxu0 0.0
  %1792 = vmatpush2.msra.mxu0 0.0
  %1793 = vmatprep.subr.mxu0 0.0
  %1794 = vmatpush2.msra.mxu0 0.0
  %1795 = vmatprep.subr.mxu0 0.0
  %1796 = vmatpush2.msra.mxu0 0.0
  %1797 = vmatprep.subr.mxu0 0.0
  %1798 = vmatpush2.msra.mxu0 0.0
  %1799 = vmatprep.subr.mxu0 0.0
  %1800 = vmatpush2.msra.mxu0 0.0
  %1801 = vmatprep.subr.mxu0 0.0
  %1802 = vmatpush2.msra.mxu0 0.0
  %1803 = vmatprep.subr.mxu0 0.0
  %1804 = vmatpush2.msra.mxu0 0.0
  %1805 = vmatprep.subr.mxu0 0.0
  %1806 = vmatpush2.msra.mxu0 0.0
  %1807 = vmatprep.subr.mxu0 0.0
  %1808 = vmatpush2.msra.mxu0 0.0
  %1809 = vmatprep.subr.mxu0 0.0
  %1810 = vmatpush2.msra.mxu0 0.0
  %1811 = vmatprep.mubr.f32.mxu0 0.0
  %1812 = vmatmul.mubr.f32.gmra.mxu0 %v1672
  %v1813 = vpop.f32.mrf.mxu0
  %v1814 = vadd.f32 0.0, %v1813
  %v1815 = vpop.f32.mrf.mxu0
  %v1816 = vadd.f32 0.0, %v1815
  %1817 = vdwg.mxu0
  %v1822 = vcombine.low %v1743, %v1745
  %v1823 = vcombine.low %v1814, %v1816
  %v1825 = vunpack.c.l.s4 1966171168
  %v1826 = vunpack.c.0.s8 %v1825
  %v1827 = vlaneseq
  %v1828 = vshrl.u32 %v1827, 7
  %v1829 = vsub.s32 %v1826, %v1828
  %v1830 = vrot.slane %v1822, %v1829
  %v1832 = vunpack.c.l.s4 1966171168
  %v1833 = vunpack.c.0.s8 %v1832
  %v1834 = vlaneseq
  %v1835 = vshrl.u32 %v1834, 7
  %v1836 = vsub.s32 %v1833, %v1835
  %v1837 = vrot.slane %v1823, %v1836
  %v1838 = vcombine.low %v1830, %v1837
  %v1840 = vunpack.c.l.s4 1966171168
  %v1841 = vunpack.c.0.s8 %v1840
  %v1842 = vlaneseq
  %v1843 = vshrl.u32 %v1842, 7
  %v1844 = vsub.s32 %v1841, %v1843
  %v1845 = vrot.slane %v1838, %v1844
  %v1847 = vadd.f32 %v1675, %v1845
  %v1848 = vxor.u32 %v1847, 2147483648
  %v1849 = vmul.f32 %v1848, 1.442695
  %v1850 = vpow.pop %v1849
  %v1851 = vadd.f32 %v1850, 1.0
  %v1852 = vrcp.pop %v1851
  %v1853 = vmul.f32 1.0, %v1852
  %v1855 = vrot.slane %v1847, 3
  %v1857 = vtanh.pop %v1855
  %v1859 = vrot.slane %v1853, 1
  %v1861 = vmul.f32 %v1859, %v1668
  %v1862 = vmul.f32 %v1853, %v1857
  %v1863 = vadd.f32 %v1861, %v1862
  %v1864 = vtanh.pop %v1863
  %v1865 = vrot.slane %v1853, 2
  %v1867 = vmul.f32 %v1865, %v1864
  %1868 = vst [vmem:[#allocation3 + $0x6] sm:$0x1] %v1867
  %s1869 = scalar_lea.vmem [#allocation2], 7
  %v1870 = vld [vmem:[%s1869] ss:$8 sm:$0xf]
  %1871 = vmatprep.subr.mxu0 %v502
  %1872 = vmatpush1.msra.mxu0 %v501
  %1873 = vmatprep.subr.mxu0 %v498
  %1874 = vmatpush1.msra.mxu0 %v497
  %1875 = vmatprep.subr.mxu0 %v494
  %1876 = vmatpush1.msra.mxu0 %v493
  %1877 = vmatprep.subr.mxu0 %v490
  %1878 = vmatpush1.msra.mxu0 %v489
  %1879 = vmatprep.subr.mxu0 %v486
  %1880 = vmatpush1.msra.mxu0 %v485
  %1881 = vmatprep.subr.mxu0 %v482
  %1882 = vmatpush1.msra.mxu0 %v481
  %1883 = vmatprep.subr.mxu0 %v478
  %1884 = vmatpush1.msra.mxu0 %v477
  %1885 = vmatprep.subr.mxu0 %v474
  %1886 = vmatpush1.msra.mxu0 %v473
  %1887 = vmatprep.subr.mxu0 %v470
  %1888 = vmatpush1.msra.mxu0 %v469
  %1889 = vmatprep.subr.mxu0 %v466
  %1890 = vmatpush1.msra.mxu0 %v465
  %1891 = vmatprep.subr.mxu0 %v462
  %1892 = vmatpush1.msra.mxu0 %v461
  %1893 = vmatprep.subr.mxu0 %v458
  %1894 = vmatpush1.msra.mxu0 %v457
  %1895 = vmatprep.subr.mxu0 %v454
  %1896 = vmatpush1.msra.mxu0 %v453
  %1897 = vmatprep.subr.mxu0 %v450
  %1898 = vmatpush1.msra.mxu0 %v449
  %1899 = vmatprep.subr.mxu0 %v446
  %1900 = vmatpush1.msra.mxu0 %v445
  %1901 = vmatprep.subr.mxu0 %v442
  %1902 = vmatpush1.msra.mxu0 %v441
  %1903 = vmatprep.subr.mxu0 0.0
  %1904 = vmatpush2.msra.mxu0 0.0
  %1905 = vmatprep.subr.mxu0 0.0
  %1906 = vmatpush2.msra.mxu0 0.0
  %1907 = vmatprep.subr.mxu0 0.0
  %1908 = vmatpush2.msra.mxu0 0.0
  %1909 = vmatprep.subr.mxu0 0.0
  %1910 = vmatpush2.msra.mxu0 0.0
  %1911 = vmatprep.subr.mxu0 0.0
  %1912 = vmatpush2.msra.mxu0 0.0
  %1913 = vmatprep.subr.mxu0 0.0
  %1914 = vmatpush2.msra.mxu0 0.0
  %1915 = vmatprep.subr.mxu0 0.0
  %1916 = vmatpush2.msra.mxu0 0.0
  %1917 = vmatprep.subr.mxu0 0.0
  %1918 = vmatpush2.msra.mxu0 0.0
  %1919 = vmatprep.subr.mxu0 0.0
  %1920 = vmatpush2.msra.mxu0 0.0
  %1921 = vmatprep.subr.mxu0 0.0
  %1922 = vmatpush2.msra.mxu0 0.0
  %1923 = vmatprep.subr.mxu0 0.0
  %1924 = vmatpush2.msra.mxu0 0.0
  %1925 = vmatprep.subr.mxu0 0.0
  %1926 = vmatpush2.msra.mxu0 0.0
  %1927 = vmatprep.subr.mxu0 0.0
  %1928 = vmatpush2.msra.mxu0 0.0
  %1929 = vmatprep.subr.mxu0 0.0
  %1930 = vmatpush2.msra.mxu0 0.0
  %1931 = vmatprep.subr.mxu0 0.0
  %1932 = vmatpush2.msra.mxu0 0.0
  %1933 = vmatprep.subr.mxu0 0.0
  %1934 = vmatpush2.msra.mxu0 0.0
  %1935 = vmatprep.mubr.f32.mxu0 0.0
  %1936 = vmatmul.mubr.f32.gmra.mxu0 %v1867
  %v1937 = vpop.f32.mrf.mxu0
  %v1938 = vadd.f32 0.0, %v1937
  %v1939 = vpop.f32.mrf.mxu0
  %v1940 = vadd.f32 0.0, %v1939
  %1941 = vdwg.mxu0
  %1942 = vmatprep.subr.mxu0 %v504
  %1943 = vmatpush1.msra.mxu0 %v503
  %1944 = vmatprep.subr.mxu0 %v500
  %1945 = vmatpush1.msra.mxu0 %v499
  %1946 = vmatprep.subr.mxu0 %v496
  %1947 = vmatpush1.msra.mxu0 %v495
  %1948 = vmatprep.subr.mxu0 %v492
  %1949 = vmatpush1.msra.mxu0 %v491
  %1950 = vmatprep.subr.mxu0 %v488
  %1951 = vmatpush1.msra.mxu0 %v487
  %1952 = vmatprep.subr.mxu0 %v484
  %1953 = vmatpush1.msra.mxu0 %v483
  %1954 = vmatprep.subr.mxu0 %v480
  %1955 = vmatpush1.msra.mxu0 %v479
  %1956 = vmatprep.subr.mxu0 %v476
  %1957 = vmatpush1.msra.mxu0 %v475
  %1958 = vmatprep.subr.mxu0 %v472
  %1959 = vmatpush1.msra.mxu0 %v471
  %1960 = vmatprep.subr.mxu0 %v468
  %1961 = vmatpush1.msra.mxu0 %v467
  %1962 = vmatprep.subr.mxu0 %v464
  %1963 = vmatpush1.msra.mxu0 %v463
  %1964 = vmatprep.subr.mxu0 %v460
  %1965 = vmatpush1.msra.mxu0 %v459
  %1966 = vmatprep.subr.mxu0 %v456
  %1967 = vmatpush1.msra.mxu0 %v455
  %1968 = vmatprep.subr.mxu0 %v452
  %1969 = vmatpush1.msra.mxu0 %v451
  %1970 = vmatprep.subr.mxu0 %v448
  %1971 = vmatpush1.msra.mxu0 %v447
  %1972 = vmatprep.subr.mxu0 %v444
  %1973 = vmatpush1.msra.mxu0 %v443
  %1974 = vmatprep.subr.mxu0 0.0
  %1975 = vmatpush2.msra.mxu0 0.0
  %1976 = vmatprep.subr.mxu0 0.0
  %1977 = vmatpush2.msra.mxu0 0.0
  %1978 = vmatprep.subr.mxu0 0.0
  %1979 = vmatpush2.msra.mxu0 0.0
  %1980 = vmatprep.subr.mxu0 0.0
  %1981 = vmatpush2.msra.mxu0 0.0
  %1982 = vmatprep.subr.mxu0 0.0
  %1983 = vmatpush2.msra.mxu0 0.0
  %1984 = vmatprep.subr.mxu0 0.0
  %1985 = vmatpush2.msra.mxu0 0.0
  %1986 = vmatprep.subr.mxu0 0.0
  %1987 = vmatpush2.msra.mxu0 0.0
  %1988 = vmatprep.subr.mxu0 0.0
  %1989 = vmatpush2.msra.mxu0 0.0
  %1990 = vmatprep.subr.mxu0 0.0
  %1991 = vmatpush2.msra.mxu0 0.0
  %1992 = vmatprep.subr.mxu0 0.0
  %1993 = vmatpush2.msra.mxu0 0.0
  %1994 = vmatprep.subr.mxu0 0.0
  %1995 = vmatpush2.msra.mxu0 0.0
  %1996 = vmatprep.subr.mxu0 0.0
  %1997 = vmatpush2.msra.mxu0 0.0
  %1998 = vmatprep.subr.mxu0 0.0
  %1999 = vmatpush2.msra.mxu0 0.0
  %2000 = vmatprep.subr.mxu0 0.0
  %2001 = vmatpush2.msra.mxu0 0.0
  %2002 = vmatprep.subr.mxu0 0.0
  %2003 = vmatpush2.msra.mxu0 0.0
  %2004 = vmatprep.subr.mxu0 0.0
  %2005 = vmatpush2.msra.mxu0 0.0
  %2006 = vmatprep.mubr.f32.mxu0 0.0
  %2007 = vmatmul.mubr.f32.gmra.mxu0 %v1867
  %v2008 = vpop.f32.mrf.mxu0
  %v2009 = vadd.f32 0.0, %v2008
  %v2010 = vpop.f32.mrf.mxu0
  %v2011 = vadd.f32 0.0, %v2010
  %2012 = vdwg.mxu0
  %v2017 = vcombine.low %v1938, %v1940
  %v2018 = vcombine.low %v2009, %v2011
  %v2020 = vunpack.c.l.s4 1966171168
  %v2021 = vunpack.c.0.s8 %v2020
  %v2022 = vlaneseq
  %v2023 = vshrl.u32 %v2022, 7
  %v2024 = vsub.s32 %v2021, %v2023
  %v2025 = vrot.slane %v2017, %v2024
  %v2027 = vunpack.c.l.s4 1966171168
  %v2028 = vunpack.c.0.s8 %v2027
  %v2029 = vlaneseq
  %v2030 = vshrl.u32 %v2029, 7
  %v2031 = vsub.s32 %v2028, %v2030
  %v2032 = vrot.slane %v2018, %v2031
  %v2033 = vcombine.low %v2025, %v2032
  %v2035 = vunpack.c.l.s4 1966171168
  %v2036 = vunpack.c.0.s8 %v2035
  %v2037 = vlaneseq
  %v2038 = vshrl.u32 %v2037, 7
  %v2039 = vsub.s32 %v2036, %v2038
  %v2040 = vrot.slane %v2033, %v2039
  %v2042 = vadd.f32 %v1870, %v2040
  %v2043 = vxor.u32 %v2042, 2147483648
  %v2044 = vmul.f32 %v2043, 1.442695
  %v2045 = vpow.pop %v2044
  %v2046 = vadd.f32 %v2045, 1.0
  %v2047 = vrcp.pop %v2046
  %v2048 = vmul.f32 1.0, %v2047
  %v2050 = vrot.slane %v2042, 3
  %v2052 = vtanh.pop %v2050
  %v2054 = vrot.slane %v2048, 1
  %v2056 = vmul.f32 %v2054, %v1863
  %v2057 = vmul.f32 %v2048, %v2052
  %v2058 = vadd.f32 %v2056, %v2057
  %v2059 = vtanh.pop %v2058
  %v2060 = vrot.slane %v2048, 2
  %v2062 = vmul.f32 %v2060, %v2059
  %2063 = vst [vmem:[#allocation3 + $0x7] sm:$0x1] %v2062
  %v2064 = vld [vmem:[#allocation3] sm:$0xff]
  %2065 = vmatprep.subr.mxu0 0.0
  %2066 = vmatpush1.msra.mxu0 0.0
  %2067 = vmatprep.subr.mxu0 0.0
  %2068 = vmatpush1.msra.mxu0 0.0
  %2069 = vmatprep.subr.mxu0 0.0
  %2070 = vmatpush1.msra.mxu0 0.0
  %2071 = vmatprep.subr.mxu0 0.0
  %2072 = vmatpush1.msra.mxu0 0.0
  %2073 = vmatprep.subr.mxu0 0.0
  %2074 = vmatpush1.msra.mxu0 0.0
  %2075 = vmatprep.subr.mxu0 0.0
  %2076 = vmatpush1.msra.mxu0 0.0
  %2077 = vmatprep.subr.mxu0 0.0
  %2078 = vmatpush1.msra.mxu0 0.0
  %2079 = vmatprep.subr.mxu0 0.0
  %2080 = vmatpush1.msra.mxu0 0.0
  %2081 = vmatprep.subr.mxu0 0.0
  %2082 = vmatpush1.msra.mxu0 0.0
  %2083 = vmatprep.subr.mxu0 0.0
  %2084 = vmatpush1.msra.mxu0 0.0
  %2085 = vmatprep.subr.mxu0 0.0
  %2086 = vmatpush1.msra.mxu0 0.0
  %2087 = vmatprep.subr.mxu0 0.0
  %2088 = vmatpush1.msra.mxu0 0.0
  %2089 = vmatprep.subr.mxu0 0.0
  %2090 = vmatpush1.msra.mxu0 0.0
  %2091 = vmatprep.subr.mxu0 0.0
  %2092 = vmatpush1.msra.mxu0 0.0
  %2093 = vmatprep.subr.mxu0 0.0
  %2094 = vmatpush1.msra.mxu0 0.0
  %2095 = vmatprep.subr.mxu0 0.0
  %2096 = vmatpush1.msra.mxu0 %v2064
  %2097 = vmatprep.subr.mxu0 0.0
  %2098 = vmatpush2.msra.mxu0 0.0
  %2099 = vmatprep.subr.mxu0 0.0
  %2100 = vmatpush2.msra.mxu0 0.0
  %2101 = vmatprep.subr.mxu0 0.0
  %2102 = vmatpush2.msra.mxu0 0.0
  %2103 = vmatprep.subr.mxu0 0.0
  %2104 = vmatpush2.msra.mxu0 0.0
  %2105 = vmatprep.subr.mxu0 0.0
  %2106 = vmatpush2.msra.mxu0 0.0
  %2107 = vmatprep.subr.mxu0 0.0
  %2108 = vmatpush2.msra.mxu0 0.0
  %2109 = vmatprep.subr.mxu0 0.0
  %2110 = vmatpush2.msra.mxu0 0.0
  %2111 = vmatprep.subr.mxu0 0.0
  %2112 = vmatpush2.msra.mxu0 0.0
  %2113 = vmatprep.subr.mxu0 0.0
  %2114 = vmatpush2.msra.mxu0 0.0
  %2115 = vmatprep.subr.mxu0 0.0
  %2116 = vmatpush2.msra.mxu0 0.0
  %2117 = vmatprep.subr.mxu0 0.0
  %2118 = vmatpush2.msra.mxu0 0.0
  %2119 = vmatprep.subr.mxu0 0.0
  %2120 = vmatpush2.msra.mxu0 0.0
  %2121 = vmatprep.subr.mxu0 0.0
  %2122 = vmatpush2.msra.mxu0 0.0
  %2123 = vmatprep.subr.mxu0 0.0
  %2124 = vmatpush2.msra.mxu0 0.0
  %2125 = vmatprep.subr.mxu0 0.0
  %2126 = vmatpush2.msra.mxu0 0.0
  %2127 = vmatprep.subr.mxu0 0.0
  %2128 = vmatpush2.msra.mxu0 0.0
  %2129 = vmatprep.mubr.f32.mxu0 0.0
  %2130 = vmatmul.mubr.f32.gmra.mxu0 %v234
  %v2131 = vpop.f32.mrf.mxu0
  %v2132 = vadd.f32 0.0, %v2131
  %v2133 = vpop.f32.mrf.mxu0
  %2134 = vdwg.mxu0
  %vm2135 = vcmp.lt.s32.totalorder %v227, 64
  %v2136 = vsel %vm2135, %v2064, %v2132
  %v2137 = vld [vmem:[%s4] sm:$0xff]
  %v2138 = vld [vmem:[%s4 + $0x8] sm:$0xff]
  %v2139 = vld [vmem:[%s4 + $0x10] sm:$0xff]
  %v2140 = vld [vmem:[%s4 + $0x18] sm:$0xff]
  %v2141 = vld [vmem:[%s4 + $0x20] sm:$0xff]
  %v2142 = vld [vmem:[%s4 + $0x28] sm:$0xff]
  %v2143 = vld [vmem:[%s4 + $0x30] sm:$0xff]
  %v2144 = vld [vmem:[%s4 + $0x38] sm:$0xff]
  %v2145 = vld [vmem:[%s4 + $0x40] sm:$0xff]
  %v2146 = vld [vmem:[%s4 + $0x48] sm:$0xff]
  %v2147 = vld [vmem:[%s4 + $0x50] sm:$0xff]
  %v2148 = vld [vmem:[%s4 + $0x58] sm:$0xff]
  %v2149 = vld [vmem:[%s4 + $0x60] sm:$0xff]
  %v2150 = vld [vmem:[%s4 + $0x68] sm:$0xff]
  %v2151 = vld [vmem:[%s4 + $0x70] sm:$0xff]
  %v2152 = vld [vmem:[%s4 + $0x78] sm:$0xff]
  %v2153 = vld [vmem:[%s5] sm:$0x1]
  %v2155 = vlaneseq
  %v2156 = vshrl.u32 %v2155, 7
  %v2157 = vsub.s32 0, %v2156
  %v2158 = vrot.slane %v2153, %v2157
  %2160 = vmatprep.subr.mxu0 0.0
  %2161 = vmatpush1.msra.mxu0 %v2152
  %2162 = vmatprep.subr.mxu0 0.0
  %2163 = vmatpush1.msra.mxu0 %v2151
  %2164 = vmatprep.subr.mxu0 0.0
  %2165 = vmatpush1.msra.mxu0 %v2150
  %2166 = vmatprep.subr.mxu0 0.0
  %2167 = vmatpush1.msra.mxu0 %v2149
  %2168 = vmatprep.subr.mxu0 0.0
  %2169 = vmatpush1.msra.mxu0 %v2148
  %2170 = vmatprep.subr.mxu0 0.0
  %2171 = vmatpush1.msra.mxu0 %v2147
  %2172 = vmatprep.subr.mxu0 0.0
  %2173 = vmatpush1.msra.mxu0 %v2146
  %2174 = vmatprep.subr.mxu0 0.0
  %2175 = vmatpush1.msra.mxu0 %v2145
  %2176 = vmatprep.subr.mxu0 0.0
  %2177 = vmatpush1.msra.mxu0 %v2144
  %2178 = vmatprep.subr.mxu0 0.0
  %2179 = vmatpush1.msra.mxu0 %v2143
  %2180 = vmatprep.subr.mxu0 0.0
  %2181 = vmatpush1.msra.mxu0 %v2142
  %2182 = vmatprep.subr.mxu0 0.0
  %2183 = vmatpush1.msra.mxu0 %v2141
  %2184 = vmatprep.subr.mxu0 0.0
  %2185 = vmatpush1.msra.mxu0 %v2140
  %2186 = vmatprep.subr.mxu0 0.0
  %2187 = vmatpush1.msra.mxu0 %v2139
  %2188 = vmatprep.subr.mxu0 0.0
  %2189 = vmatpush1.msra.mxu0 %v2138
  %2190 = vmatprep.subr.mxu0 0.0
  %2191 = vmatpush1.msra.mxu0 %v2137
  %2192 = vmatprep.subr.mxu0 0.0
  %2193 = vmatpush2.msra.mxu0 0.0
  %2194 = vmatprep.subr.mxu0 0.0
  %2195 = vmatpush2.msra.mxu0 0.0
  %2196 = vmatprep.subr.mxu0 0.0
  %2197 = vmatpush2.msra.mxu0 0.0
  %2198 = vmatprep.subr.mxu0 0.0
  %2199 = vmatpush2.msra.mxu0 0.0
  %2200 = vmatprep.subr.mxu0 0.0
  %2201 = vmatpush2.msra.mxu0 0.0
  %2202 = vmatprep.subr.mxu0 0.0
  %2203 = vmatpush2.msra.mxu0 0.0
  %2204 = vmatprep.subr.mxu0 0.0
  %2205 = vmatpush2.msra.mxu0 0.0
  %2206 = vmatprep.subr.mxu0 0.0
  %2207 = vmatpush2.msra.mxu0 0.0
  %2208 = vmatprep.subr.mxu0 0.0
  %2209 = vmatpush2.msra.mxu0 0.0
  %2210 = vmatprep.subr.mxu0 0.0
  %2211 = vmatpush2.msra.mxu0 0.0
  %2212 = vmatprep.subr.mxu0 0.0
  %2213 = vmatpush2.msra.mxu0 0.0
  %2214 = vmatprep.subr.mxu0 0.0
  %2215 = vmatpush2.msra.mxu0 0.0
  %2216 = vmatprep.subr.mxu0 0.0
  %2217 = vmatpush2.msra.mxu0 0.0
  %2218 = vmatprep.subr.mxu0 0.0
  %2219 = vmatpush2.msra.mxu0 0.0
  %2220 = vmatprep.subr.mxu0 0.0
  %2221 = vmatpush2.msra.mxu0 0.0
  %2222 = vmatprep.subr.mxu0 0.0
  %2223 = vmatpush2.msra.mxu0 0.0
  %2224 = vmatprep.mubr.f32.mxu0 0.0
  %2225 = vmatmul.mubr.f32.gmra.mxu0 %v2136
  %v2226 = vpop.f32.mrf.mxu0
  %v2227 = vadd.f32 %v2158, %v2226
  %v2228 = vpop.f32.mrf.mxu0
  %2229 = vdwg.mxu0
  %2230 = vst [vmem:[%s6] sm:$0xff] %v2227
  // Predicated region
  $region26: #{bilstm_crf_forward.1} parent=0 // pred_check
    _
  $region27: #{bilstm_crf_forward.1} parent=0 // pred_check_branch
    %2232 = sbr.rel (0) target = $region29
  $region28: #{bilstm_crf_forward.1} parent=0 // pred_region
    _
  $region29: #{bilstm_crf_forward.1} parent=0 // pred_fallthru
    _
  // Predicated region
  $region30: #{bilstm_crf_forward.1} parent=0 // pred_check
    _
  $region31: #{bilstm_crf_forward.1} parent=0 // pred_check_branch
    %2234 = sbr.rel (0) target = $region33
  $region32: #{bilstm_crf_forward.1} parent=0 // pred_region
    _
  $region33: #{bilstm_crf_forward.1} parent=0 // pred_fallthru
    _

</llo_original>
